<compile_context>
chip_gen: v5e
topology: v5e:2x2
jax: 0.10.0
libtpu: 0.0.40
codegen_flags: <defaults>
</compile_context>

<pallas_src>
import functools

import numpy as np

import jax
import jax.numpy as jnp
from jax.experimental import pallas as pl
from jax.experimental.pallas import tpu as pltpu


# ---------------------------------------------------------------------------
# The fused per-sample kernel
# ---------------------------------------------------------------------------
def _lenet5_kernel(x_ref, w1_ref, b1_ref, s14_ref, w2_ref, b2_ref, s5_ref,
                   wf_ref, bf_ref, w3_ref, b3_ref, w4_ref, b4_ref, out_ref):
    f32 = jnp.float32
    x = x_ref[0]                                                   # (32, 32)

    # ---- conv1 (1 -> 6, 5x5) + folded BN + ReLU ----------------------------
    # 5 MXU matmuls (one per kernel row), accumulated in registers.
    # Output layout: rows = out y (28), lanes = c*28 + out x  (168 lanes).
    z1 = jnp.dot(x[0:28, :], w1_ref[0], preferred_element_type=f32)
    for i in range(1, 5):
        z1 = z1 + jnp.dot(x[i:i + 28, :], w1_ref[i], preferred_element_type=f32)
    z1 = jnp.maximum(z1 + b1_ref[...], 0.0)                        # (28, 168)

    # ---- maxpool1 2x2/2 -----------------------------------------------------
    p1 = jnp.maximum(z1[0:27, :], z1[1:28, :])                     # y pair-max
    m1 = jnp.maximum(p1[:, 0:167], p1[:, 1:168])                   # x pair-max
    a1 = jnp.dot(s14_ref[...], m1, preferred_element_type=f32)     # even rows -> (14, 167)

    # ---- conv2 (6 -> C2, 5x5) + folded BN + ReLU ---------------------------
    # pool1's stride-2 x-downsample is folded into the weights, so each of the
    # 5 matmuls is lane-dense with K=167, N=C2*10.
    z2 = jnp.dot(a1[0:10, :], w2_ref[0], preferred_element_type=f32)
    for i in range(1, 5):
        z2 = z2 + jnp.dot(a1[i:i + 10, :], w2_ref[i], preferred_element_type=f32)
    z2 = jnp.maximum(z2 + b2_ref[...], 0.0)                        # (10, C2*10)

    # ---- maxpool2 2x2/2 -----------------------------------------------------
    p2 = jnp.maximum(z2[0:9, :], z2[1:10, :])
    m2 = jnp.maximum(p2[:, 0:159], p2[:, 1:160])
    a2 = jnp.dot(s5_ref[...], m2, preferred_element_type=f32)      # (5, 159)

    # ---- fc (C2*25 -> 120) + ReLU: 5 K=159 matmuls (downsample folded) -----
    h = jnp.dot(a2[0:1, :], wf_ref[0], preferred_element_type=f32)
    for y2 in range(1, 5):
        h = h + jnp.dot(a2[y2:y2 + 1, :], wf_ref[y2], preferred_element_type=f32)
    h = jnp.maximum(h + bf_ref[...], 0.0)                          # (1, 120)

    # ---- fc1 (120 -> 84) + ReLU, fc2 (84 -> 128-lane-padded classes) -------
    h1 = jnp.maximum(
        jnp.dot(h, w3_ref[...], preferred_element_type=f32) + b3_ref[...], 0.0)
    out = jnp.dot(h1, w4_ref[...], preferred_element_type=f32) + b4_ref[...]
    out_ref[0] = out.astype(out_ref.dtype)                         # (1, 128) dense store


# ---------------------------------------------------------------------------
# One-time host-side parameter prep (BN folding, weight flattening, padding)
# ---------------------------------------------------------------------------
def prepare_params(params, eps=1e-5):
    p = {k: np.asarray(v, np.float64) for k, v in params.items()}
    C2 = p["conv2_w"].shape[0]
    num_classes = p["fc2_w"].shape[0]
    assert num_classes <= 128

    sc1 = p["bn1_gamma"] / np.sqrt(p["bn1_var"] + eps)
    sh1 = (p["conv1_b"] - p["bn1_mean"]) * sc1 + p["bn1_beta"]
    sc2 = p["bn2_gamma"] / np.sqrt(p["bn2_var"] + eps)
    sh2 = (p["conv2_b"] - p["bn2_mean"]) * sc2 + p["bn2_beta"]

    # conv1: W1[i, xin, c*28 + xout] = w1[c, 0, i, xin - xout] * sc1[c]
    W1 = np.zeros((5, 32, 6 * 28), np.float64)
    for i in range(5):
        for j in range(5):
            for c in range(6):
                w = p["conv1_w"][c, 0, i, j] * sc1[c]
                for xo in range(28):
                    W1[i, xo + j, c * 28 + xo] = w
    B1 = np.repeat(sh1, 28)[None, :]                               # (1, 168)

    S14 = np.zeros((14, 27), np.float64)                           # even-row gather pool1
    S14[np.arange(14), 2 * np.arange(14)] = 1.0

    # conv2: W2[i, cin*28 + 2*(X+j), o*10 + X] = w2[o, cin, i, j] * sc2[o]
    W2 = np.zeros((5, 167, C2 * 10), np.float64)
    ocols = np.arange(C2) * 10
    for i in range(5):
        for j in range(5):
            for cin in range(6):
                w = p["conv2_w"][:, cin, i, j] * sc2               # (C2,)
                for X in range(10):
                    W2[i, cin * 28 + 2 * (X + j), ocols + X] = w
    B2 = np.repeat(sh2, 10)[None, :]                               # (1, C2*10)

    S5 = np.zeros((5, 9), np.float64)                              # even-row gather pool2
    S5[np.arange(5), 2 * np.arange(5)] = 1.0

    # fc: WF[y2, o*10 + 2*x2, f] = fc_w[f, o*25 + y2*5 + x2]
    WF = np.zeros((5, 159, 120), np.float64)
    for y2 in range(5):
        for o in range(C2):
            for x2 in range(5):
                WF[y2, o * 10 + 2 * x2, :] = p["fc_w"][:, o * 25 + y2 * 5 + x2]
    bF = p["fc_b"][None, :]

    W3 = p["fc1_w"].T                                              # (120, 84)
    b3 = p["fc1_b"][None, :]
    W4 = np.zeros((84, 128), np.float64)                           # lane-padded classifier
    W4[:, :num_classes] = p["fc2_w"].T
    b4 = np.zeros((1, 128), np.float64)
    b4[0, :num_classes] = p["fc2_b"]

    f32 = jnp.float32
    return {
        "W1": jnp.asarray(W1, f32), "B1": jnp.asarray(B1, f32),
        "S14": jnp.asarray(S14, f32),
        "W2": jnp.asarray(W2, f32), "B2": jnp.asarray(B2, f32),
        "S5": jnp.asarray(S5, f32),
        "WF": jnp.asarray(WF, f32), "bF": jnp.asarray(bF, f32),
        "W3": jnp.asarray(W3, f32), "b3": jnp.asarray(b3, f32),
        "W4": jnp.asarray(W4, f32), "b4": jnp.asarray(b4, f32),
    }


# ---------------------------------------------------------------------------
# Forward pass (matches LeNet5.forward, eval mode)
# ---------------------------------------------------------------------------
_WEIGHT_NAMES = ("W1", "B1", "S14", "W2", "B2", "S5",
                 "WF", "bF", "W3", "b3", "W4", "b4")


def lenet5_forward(prepped, x, num_classes):
    n = x.shape[0]
    assert x.shape[1:] == (1, 32, 32), "LeNet5 expects (N, 1, 32, 32) inputs"
    xs = x.reshape(n, 32, 32).astype(jnp.float32)
    weights = [prepped[k] for k in _WEIGHT_NAMES]

    def wspec(a):
        zeros = (0,) * a.ndim
        return pl.BlockSpec(a.shape, lambda i, _z=zeros: _z)       # resident weights

    out = pl.pallas_call(
        _lenet5_kernel,
        out_shape=jax.ShapeDtypeStruct((n, 1, 128), jnp.float32),
        grid=(n,),
        in_specs=[pl.BlockSpec((1, 32, 32), lambda i: (i, 0, 0))]
                 + [wspec(a) for a in weights],
        out_specs=pl.BlockSpec((1, 1, 128), lambda i: (i, 0, 0)),
        compiler_params=pltpu.CompilerParams(
            dimension_semantics=("parallel",)),
    )(xs, *weights)
    return out.reshape(n, 128)[:, :num_classes]


# ---------------------------------------------------------------------------
# Deterministic synthetic parameters (shapes from LeNet5.__init__)
# ---------------------------------------------------------------------------
def init_params(key, num_classes=27, batch_size=16):
    keys = jax.random.split(key, 10)

    def u(k, shape, fan_in):
        bound = 1.0 / jnp.sqrt(float(fan_in))
        return jax.random.uniform(k, shape, jnp.float32, -bound, bound)

    C2 = batch_size  # nn.Conv2d(6, batch_size, ...) -> second conv channels
    return {
        "conv1_w": u(keys[0], (6, 1, 5, 5), 1 * 25),
        "conv1_b": u(keys[1], (6,), 1 * 25),
        "bn1_gamma": jnp.ones((6,), jnp.float32),
        "bn1_beta": jnp.zeros((6,), jnp.float32),
        "bn1_mean": jnp.zeros((6,), jnp.float32),
        "bn1_var": jnp.ones((6,), jnp.float32),
        "conv2_w": u(keys[2], (C2, 6, 5, 5), 6 * 25),
        "conv2_b": u(keys[3], (C2,), 6 * 25),
        "bn2_gamma": jnp.ones((C2,), jnp.float32),
        "bn2_beta": jnp.zeros((C2,), jnp.float32),
        "bn2_mean": jnp.zeros((C2,), jnp.float32),
        "bn2_var": jnp.ones((C2,), jnp.float32),
        "fc_w": u(keys[4], (120, C2 * 5 * 5), C2 * 25),
        "fc_b": u(keys[5], (120,), C2 * 25),
        "fc1_w": u(keys[6], (84, 120), 120),
        "fc1_b": u(keys[7], (84,), 120),
        "fc2_w": u(keys[8], (num_classes, 84), 84),
        "fc2_b": u(keys[9], (num_classes,), 84),
    }


# ---------------------------------------------------------------------------
# Independent float64 numpy reference (eval mode, dropout = identity)
# ---------------------------------------------------------------------------
def lenet5_reference_np(params, x, eps=1e-5):
    p = {k: np.asarray(v, np.float64) for k, v in params.items()}
    y = np.asarray(x, np.float64)

    def conv(a, w, b):
        n, cin, h, wd = a.shape
        cout, _, kh, kw = w.shape
        ho, wo = h - kh + 1, wd - kw + 1
        out = np.zeros((n, cout, ho, wo))
        for i in range(kh):
            for j in range(kw):
                out += np.einsum('ncyx,oc->noyx', a[:, :, i:i + ho, j:j + wo],
                                 w[:, :, i, j])
        return out + b[None, :, None, None]

    def bn(a, g, be, m, v):
        return (a - m[None, :, None, None]) / np.sqrt(v[None, :, None, None] + eps) \
            * g[None, :, None, None] + be[None, :, None, None]

    def pool(a):
        n, c, h, w = a.shape
        return a.reshape(n, c, h // 2, 2, w // 2, 2).max(axis=(3, 5))

    y = pool(np.maximum(bn(conv(y, p["conv1_w"], p["conv1_b"]), p["bn1_gamma"],
                           p["bn1_beta"], p["bn1_mean"], p["bn1_var"]), 0.0))
    y = pool(np.maximum(bn(conv(y, p["conv2_w"], p["conv2_b"]), p["bn2_gamma"],
                           p["bn2_beta"], p["bn2_mean"], p["bn2_var"]), 0.0))
    y = y.reshape(y.shape[0], -1)
    y = np.maximum(y @ p["fc_w"].T + p["fc_b"], 0.0)
    y = np.maximum(y @ p["fc1_w"].T + p["fc1_b"], 0.0)
    return y @ p["fc2_w"].T + p["fc2_b"]


if __name__ == "__main__":
    key = jax.random.PRNGKey(0)
    pkey, xkey = jax.random.split(key)
    num_classes = 27
    params = init_params(pkey, num_classes=num_classes, batch_size=16)
    x = jax.random.normal(xkey, (2, 1, 32, 32), jnp.float32)

    prepped = prepare_params(params)            # one-time host-side weight prep
    fwd = jax.jit(functools.partial(lenet5_forward, num_classes=num_classes))
    out = jax.block_until_ready(fwd(prepped, x))

    assert out.shape == (2, num_classes), out.shape
    assert out.dtype == jnp.float32

    ref = lenet5_reference_np(params, x)
    max_diff = float(np.max(np.abs(np.asarray(out, np.float64) - ref)))
    assert max_diff < 1e-3, max_diff

    print("KERNEL_OK")
</pallas_src>

<mosaic_0001>
module attributes {stable_mosaic.version = 11 : i64} {
  func.func @_lenet5_kernel(%arg0: i32, %arg1: memref<1x32x32xf32, #tpu.memory_space<vmem>>, %arg2: memref<5x32x168xf32, #tpu.memory_space<vmem>>, %arg3: memref<1x168xf32, #tpu.memory_space<vmem>>, %arg4: memref<14x27xf32, #tpu.memory_space<vmem>>, %arg5: memref<5x167x160xf32, #tpu.memory_space<vmem>>, %arg6: memref<1x160xf32, #tpu.memory_space<vmem>>, %arg7: memref<5x9xf32, #tpu.memory_space<vmem>>, %arg8: memref<5x159x120xf32, #tpu.memory_space<vmem>>, %arg9: memref<1x120xf32, #tpu.memory_space<vmem>>, %arg10: memref<120x84xf32, #tpu.memory_space<vmem>>, %arg11: memref<1x84xf32, #tpu.memory_space<vmem>>, %arg12: memref<84x128xf32, #tpu.memory_space<vmem>>, %arg13: memref<1x128xf32, #tpu.memory_space<vmem>>, %arg14: memref<1x1x128xf32, #tpu.memory_space<vmem>>) attributes {dimension_semantics = [#tpu.dimension_semantics<parallel>], iteration_bounds = array<i64: 2>, scalar_prefetch = 0 : i64, scratch_operands = 0 : i64, tpu.core_type = #tpu.core_type<tc>, window_params = [{transform_indices = @transform_0, window_bounds = array<i64: 1, 32, 32>}, {pipeline_mode = #tpu.pipeline_mode<synchronous>, transform_indices = @transform_1, window_bounds = array<i64: 5, 32, 168>}, {pipeline_mode = #tpu.pipeline_mode<synchronous>, transform_indices = @transform_2, window_bounds = array<i64: 1, 168>}, {pipeline_mode = #tpu.pipeline_mode<synchronous>, transform_indices = @transform_3, window_bounds = array<i64: 14, 27>}, {pipeline_mode = #tpu.pipeline_mode<synchronous>, transform_indices = @transform_4, window_bounds = array<i64: 5, 167, 160>}, {pipeline_mode = #tpu.pipeline_mode<synchronous>, transform_indices = @transform_5, window_bounds = array<i64: 1, 160>}, {pipeline_mode = #tpu.pipeline_mode<synchronous>, transform_indices = @transform_6, window_bounds = array<i64: 5, 9>}, {pipeline_mode = #tpu.pipeline_mode<synchronous>, transform_indices = @transform_7, window_bounds = array<i64: 5, 159, 120>}, {pipeline_mode = #tpu.pipeline_mode<synchronous>, transform_indices = @transform_8, window_bounds = array<i64: 1, 120>}, {pipeline_mode = #tpu.pipeline_mode<synchronous>, transform_indices = @transform_9, window_bounds = array<i64: 120, 84>}, {pipeline_mode = #tpu.pipeline_mode<synchronous>, transform_indices = @transform_10, window_bounds = array<i64: 1, 84>}, {pipeline_mode = #tpu.pipeline_mode<synchronous>, transform_indices = @transform_11, window_bounds = array<i64: 84, 128>}, {pipeline_mode = #tpu.pipeline_mode<synchronous>, transform_indices = @transform_12, window_bounds = array<i64: 1, 128>}, {transform_indices = @transform_13, window_bounds = array<i64: 1, 1, 128>}]} {
    %c0 = arith.constant 0 : index
    %c0_0 = arith.constant 0 : index
    %c0_1 = arith.constant 0 : index
    %0 = vector.load %arg1[%c0, %c0_0, %c0_1] : memref<1x32x32xf32, #tpu.memory_space<vmem>>, vector<1x32x32xf32>
    %1 = vector.shape_cast %0 : vector<1x32x32xf32> to vector<32x32xf32>
    %2 = vector.extract_strided_slice %1 {offsets = [0, 0], sizes = [28, 32], strides = [1, 1]} : vector<32x32xf32> to vector<28x32xf32>
    %c0_2 = arith.constant 0 : index
    %c0_3 = arith.constant 0 : index
    %c0_4 = arith.constant 0 : index
    %3 = vector.load %arg2[%c0_2, %c0_3, %c0_4] : memref<5x32x168xf32, #tpu.memory_space<vmem>>, vector<1x32x168xf32>
    %4 = vector.shape_cast %3 : vector<1x32x168xf32> to vector<32x168xf32>
    %cst = arith.constant dense<0.000000e+00> : vector<28x168xf32>
    %5 = tpu.matmul %2, %4, %cst {dimension_numbers = #tpu.dot_dimension_numbers<[1], [0], [0], [1], [0, 0, 1, 1], [], []>} : vector<28x32xf32>, vector<32x168xf32>, vector<28x168xf32> -> vector<28x168xf32>
    %6 = vector.extract_strided_slice %1 {offsets = [1, 0], sizes = [28, 32], strides = [1, 1]} : vector<32x32xf32> to vector<28x32xf32>
    %c1 = arith.constant 1 : index
    %c0_5 = arith.constant 0 : index
    %c0_6 = arith.constant 0 : index
    %7 = vector.load %arg2[%c1, %c0_5, %c0_6] : memref<5x32x168xf32, #tpu.memory_space<vmem>>, vector<1x32x168xf32>
    %8 = vector.shape_cast %7 : vector<1x32x168xf32> to vector<32x168xf32>
    %cst_7 = arith.constant dense<0.000000e+00> : vector<28x168xf32>
    %9 = tpu.matmul %6, %8, %cst_7 {dimension_numbers = #tpu.dot_dimension_numbers<[1], [0], [0], [1], [0, 0, 1, 1], [], []>} : vector<28x32xf32>, vector<32x168xf32>, vector<28x168xf32> -> vector<28x168xf32>
    %10 = arith.addf %5, %9 : vector<28x168xf32>
    %11 = vector.extract_strided_slice %1 {offsets = [2, 0], sizes = [28, 32], strides = [1, 1]} : vector<32x32xf32> to vector<28x32xf32>
    %c2 = arith.constant 2 : index
    %c0_8 = arith.constant 0 : index
    %c0_9 = arith.constant 0 : index
    %12 = vector.load %arg2[%c2, %c0_8, %c0_9] : memref<5x32x168xf32, #tpu.memory_space<vmem>>, vector<1x32x168xf32>
    %13 = vector.shape_cast %12 : vector<1x32x168xf32> to vector<32x168xf32>
    %cst_10 = arith.constant dense<0.000000e+00> : vector<28x168xf32>
    %14 = tpu.matmul %11, %13, %cst_10 {dimension_numbers = #tpu.dot_dimension_numbers<[1], [0], [0], [1], [0, 0, 1, 1], [], []>} : vector<28x32xf32>, vector<32x168xf32>, vector<28x168xf32> -> vector<28x168xf32>
    %15 = arith.addf %10, %14 : vector<28x168xf32>
    %16 = vector.extract_strided_slice %1 {offsets = [3, 0], sizes = [28, 32], strides = [1, 1]} : vector<32x32xf32> to vector<28x32xf32>
    %c3 = arith.constant 3 : index
    %c0_11 = arith.constant 0 : index
    %c0_12 = arith.constant 0 : index
    %17 = vector.load %arg2[%c3, %c0_11, %c0_12] : memref<5x32x168xf32, #tpu.memory_space<vmem>>, vector<1x32x168xf32>
    %18 = vector.shape_cast %17 : vector<1x32x168xf32> to vector<32x168xf32>
    %cst_13 = arith.constant dense<0.000000e+00> : vector<28x168xf32>
    %19 = tpu.matmul %16, %18, %cst_13 {dimension_numbers = #tpu.dot_dimension_numbers<[1], [0], [0], [1], [0, 0, 1, 1], [], []>} : vector<28x32xf32>, vector<32x168xf32>, vector<28x168xf32> -> vector<28x168xf32>
    %20 = arith.addf %15, %19 : vector<28x168xf32>
    %21 = vector.extract_strided_slice %1 {offsets = [4, 0], sizes = [28, 32], strides = [1, 1]} : vector<32x32xf32> to vector<28x32xf32>
    %c4 = arith.constant 4 : index
    %c0_14 = arith.constant 0 : index
    %c0_15 = arith.constant 0 : index
    %22 = vector.load %arg2[%c4, %c0_14, %c0_15] : memref<5x32x168xf32, #tpu.memory_space<vmem>>, vector<1x32x168xf32>
    %23 = vector.shape_cast %22 : vector<1x32x168xf32> to vector<32x168xf32>
    %cst_16 = arith.constant dense<0.000000e+00> : vector<28x168xf32>
    %24 = tpu.matmul %21, %23, %cst_16 {dimension_numbers = #tpu.dot_dimension_numbers<[1], [0], [0], [1], [0, 0, 1, 1], [], []>} : vector<28x32xf32>, vector<32x168xf32>, vector<28x168xf32> -> vector<28x168xf32>
    %25 = arith.addf %20, %24 : vector<28x168xf32>
    %c0_17 = arith.constant 0 : index
    %c0_18 = arith.constant 0 : index
    %26 = vector.load %arg3[%c0_17, %c0_18] : memref<1x168xf32, #tpu.memory_space<vmem>>, vector<1x168xf32>
    %27 = vector.broadcast %26 : vector<1x168xf32> to vector<28x168xf32>
    %28 = arith.addf %25, %27 : vector<28x168xf32>
    %cst_19 = arith.constant 0.000000e+00 : f32
    %29 = vector.broadcast %cst_19 : f32 to vector<28x168xf32>
    %30 = arith.maximumf %28, %29 : vector<28x168xf32>
    %31 = vector.extract_strided_slice %30 {offsets = [0, 0], sizes = [27, 168], strides = [1, 1]} : vector<28x168xf32> to vector<27x168xf32>
    %32 = vector.extract_strided_slice %30 {offsets = [1, 0], sizes = [27, 168], strides = [1, 1]} : vector<28x168xf32> to vector<27x168xf32>
    %33 = arith.maximumf %31, %32 : vector<27x168xf32>
    %34 = vector.extract_strided_slice %33 {offsets = [0, 0], sizes = [27, 167], strides = [1, 1]} : vector<27x168xf32> to vector<27x167xf32>
    %35 = vector.extract_strided_slice %33 {offsets = [0, 1], sizes = [27, 167], strides = [1, 1]} : vector<27x168xf32> to vector<27x167xf32>
    %36 = arith.maximumf %34, %35 : vector<27x167xf32>
    %c0_20 = arith.constant 0 : index
    %c0_21 = arith.constant 0 : index
    %37 = vector.load %arg4[%c0_20, %c0_21] : memref<14x27xf32, #tpu.memory_space<vmem>>, vector<14x27xf32>
    %cst_22 = arith.constant dense<0.000000e+00> : vector<14x167xf32>
    %38 = tpu.matmul %37, %36, %cst_22 {dimension_numbers = #tpu.dot_dimension_numbers<[1], [0], [0], [1], [0, 0, 1, 1], [], []>} : vector<14x27xf32>, vector<27x167xf32>, vector<14x167xf32> -> vector<14x167xf32>
    %39 = vector.extract_strided_slice %38 {offsets = [0, 0], sizes = [10, 167], strides = [1, 1]} : vector<14x167xf32> to vector<10x167xf32>
    %c0_23 = arith.constant 0 : index
    %c0_24 = arith.constant 0 : index
    %c0_25 = arith.constant 0 : index
    %40 = vector.load %arg5[%c0_23, %c0_24, %c0_25] : memref<5x167x160xf32, #tpu.memory_space<vmem>>, vector<1x167x160xf32>
    %41 = vector.shape_cast %40 : vector<1x167x160xf32> to vector<167x160xf32>
    %cst_26 = arith.constant dense<0.000000e+00> : vector<10x160xf32>
    %42 = tpu.matmul %39, %41, %cst_26 {dimension_numbers = #tpu.dot_dimension_numbers<[1], [0], [0], [1], [0, 0, 1, 1], [], []>} : vector<10x167xf32>, vector<167x160xf32>, vector<10x160xf32> -> vector<10x160xf32>
    %43 = vector.extract_strided_slice %38 {offsets = [1, 0], sizes = [10, 167], strides = [1, 1]} : vector<14x167xf32> to vector<10x167xf32>
    %c1_27 = arith.constant 1 : index
    %c0_28 = arith.constant 0 : index
    %c0_29 = arith.constant 0 : index
    %44 = vector.load %arg5[%c1_27, %c0_28, %c0_29] : memref<5x167x160xf32, #tpu.memory_space<vmem>>, vector<1x167x160xf32>
    %45 = vector.shape_cast %44 : vector<1x167x160xf32> to vector<167x160xf32>
    %cst_30 = arith.constant dense<0.000000e+00> : vector<10x160xf32>
    %46 = tpu.matmul %43, %45, %cst_30 {dimension_numbers = #tpu.dot_dimension_numbers<[1], [0], [0], [1], [0, 0, 1, 1], [], []>} : vector<10x167xf32>, vector<167x160xf32>, vector<10x160xf32> -> vector<10x160xf32>
    %47 = arith.addf %42, %46 : vector<10x160xf32>
    %48 = vector.extract_strided_slice %38 {offsets = [2, 0], sizes = [10, 167], strides = [1, 1]} : vector<14x167xf32> to vector<10x167xf32>
    %c2_31 = arith.constant 2 : index
    %c0_32 = arith.constant 0 : index
    %c0_33 = arith.constant 0 : index
    %49 = vector.load %arg5[%c2_31, %c0_32, %c0_33] : memref<5x167x160xf32, #tpu.memory_space<vmem>>, vector<1x167x160xf32>
    %50 = vector.shape_cast %49 : vector<1x167x160xf32> to vector<167x160xf32>
    %cst_34 = arith.constant dense<0.000000e+00> : vector<10x160xf32>
    %51 = tpu.matmul %48, %50, %cst_34 {dimension_numbers = #tpu.dot_dimension_numbers<[1], [0], [0], [1], [0, 0, 1, 1], [], []>} : vector<10x167xf32>, vector<167x160xf32>, vector<10x160xf32> -> vector<10x160xf32>
    %52 = arith.addf %47, %51 : vector<10x160xf32>
    %53 = vector.extract_strided_slice %38 {offsets = [3, 0], sizes = [10, 167], strides = [1, 1]} : vector<14x167xf32> to vector<10x167xf32>
    %c3_35 = arith.constant 3 : index
    %c0_36 = arith.constant 0 : index
    %c0_37 = arith.constant 0 : index
    %54 = vector.load %arg5[%c3_35, %c0_36, %c0_37] : memref<5x167x160xf32, #tpu.memory_space<vmem>>, vector<1x167x160xf32>
    %55 = vector.shape_cast %54 : vector<1x167x160xf32> to vector<167x160xf32>
    %cst_38 = arith.constant dense<0.000000e+00> : vector<10x160xf32>
    %56 = tpu.matmul %53, %55, %cst_38 {dimension_numbers = #tpu.dot_dimension_numbers<[1], [0], [0], [1], [0, 0, 1, 1], [], []>} : vector<10x167xf32>, vector<167x160xf32>, vector<10x160xf32> -> vector<10x160xf32>
    %57 = arith.addf %52, %56 : vector<10x160xf32>
    %58 = vector.extract_strided_slice %38 {offsets = [4, 0], sizes = [10, 167], strides = [1, 1]} : vector<14x167xf32> to vector<10x167xf32>
    %c4_39 = arith.constant 4 : index
    %c0_40 = arith.constant 0 : index
    %c0_41 = arith.constant 0 : index
    %59 = vector.load %arg5[%c4_39, %c0_40, %c0_41] : memref<5x167x160xf32, #tpu.memory_space<vmem>>, vector<1x167x160xf32>
    %60 = vector.shape_cast %59 : vector<1x167x160xf32> to vector<167x160xf32>
    %cst_42 = arith.constant dense<0.000000e+00> : vector<10x160xf32>
    %61 = tpu.matmul %58, %60, %cst_42 {dimension_numbers = #tpu.dot_dimension_numbers<[1], [0], [0], [1], [0, 0, 1, 1], [], []>} : vector<10x167xf32>, vector<167x160xf32>, vector<10x160xf32> -> vector<10x160xf32>
    %62 = arith.addf %57, %61 : vector<10x160xf32>
    %c0_43 = arith.constant 0 : index
    %c0_44 = arith.constant 0 : index
    %63 = vector.load %arg6[%c0_43, %c0_44] : memref<1x160xf32, #tpu.memory_space<vmem>>, vector<1x160xf32>
    %64 = vector.broadcast %63 : vector<1x160xf32> to vector<10x160xf32>
    %65 = arith.addf %62, %64 : vector<10x160xf32>
    %cst_45 = arith.constant 0.000000e+00 : f32
    %66 = vector.broadcast %cst_45 : f32 to vector<10x160xf32>
    %67 = arith.maximumf %65, %66 : vector<10x160xf32>
    %68 = vector.extract_strided_slice %67 {offsets = [0, 0], sizes = [9, 160], strides = [1, 1]} : vector<10x160xf32> to vector<9x160xf32>
    %69 = vector.extract_strided_slice %67 {offsets = [1, 0], sizes = [9, 160], strides = [1, 1]} : vector<10x160xf32> to vector<9x160xf32>
    %70 = arith.maximumf %68, %69 : vector<9x160xf32>
    %71 = vector.extract_strided_slice %70 {offsets = [0, 0], sizes = [9, 159], strides = [1, 1]} : vector<9x160xf32> to vector<9x159xf32>
    %72 = vector.extract_strided_slice %70 {offsets = [0, 1], sizes = [9, 159], strides = [1, 1]} : vector<9x160xf32> to vector<9x159xf32>
    %73 = arith.maximumf %71, %72 : vector<9x159xf32>
    %c0_46 = arith.constant 0 : index
    %c0_47 = arith.constant 0 : index
    %74 = vector.load %arg7[%c0_46, %c0_47] : memref<5x9xf32, #tpu.memory_space<vmem>>, vector<5x9xf32>
    %cst_48 = arith.constant dense<0.000000e+00> : vector<5x159xf32>
    %75 = tpu.matmul %74, %73, %cst_48 {dimension_numbers = #tpu.dot_dimension_numbers<[1], [0], [0], [1], [0, 0, 1, 1], [], []>} : vector<5x9xf32>, vector<9x159xf32>, vector<5x159xf32> -> vector<5x159xf32>
    %76 = vector.extract_strided_slice %75 {offsets = [0, 0], sizes = [1, 159], strides = [1, 1]} : vector<5x159xf32> to vector<1x159xf32>
    %c0_49 = arith.constant 0 : index
    %c0_50 = arith.constant 0 : index
    %c0_51 = arith.constant 0 : index
    %77 = vector.load %arg8[%c0_49, %c0_50, %c0_51] : memref<5x159x120xf32, #tpu.memory_space<vmem>>, vector<1x159x120xf32>
    %78 = vector.shape_cast %77 : vector<1x159x120xf32> to vector<159x120xf32>
    %cst_52 = arith.constant dense<0.000000e+00> : vector<1x120xf32>
    %79 = tpu.matmul %76, %78, %cst_52 {dimension_numbers = #tpu.dot_dimension_numbers<[1], [0], [0], [1], [0, 0, 1, 1], [], []>} : vector<1x159xf32>, vector<159x120xf32>, vector<1x120xf32> -> vector<1x120xf32>
    %80 = vector.extract_strided_slice %75 {offsets = [1, 0], sizes = [1, 159], strides = [1, 1]} : vector<5x159xf32> to vector<1x159xf32>
    %c1_53 = arith.constant 1 : index
    %c0_54 = arith.constant 0 : index
    %c0_55 = arith.constant 0 : index
    %81 = vector.load %arg8[%c1_53, %c0_54, %c0_55] : memref<5x159x120xf32, #tpu.memory_space<vmem>>, vector<1x159x120xf32>
    %82 = vector.shape_cast %81 : vector<1x159x120xf32> to vector<159x120xf32>
    %cst_56 = arith.constant dense<0.000000e+00> : vector<1x120xf32>
    %83 = tpu.matmul %80, %82, %cst_56 {dimension_numbers = #tpu.dot_dimension_numbers<[1], [0], [0], [1], [0, 0, 1, 1], [], []>} : vector<1x159xf32>, vector<159x120xf32>, vector<1x120xf32> -> vector<1x120xf32>
    %84 = arith.addf %79, %83 : vector<1x120xf32>
    %85 = vector.extract_strided_slice %75 {offsets = [2, 0], sizes = [1, 159], strides = [1, 1]} : vector<5x159xf32> to vector<1x159xf32>
    %c2_57 = arith.constant 2 : index
    %c0_58 = arith.constant 0 : index
    %c0_59 = arith.constant 0 : index
    %86 = vector.load %arg8[%c2_57, %c0_58, %c0_59] : memref<5x159x120xf32, #tpu.memory_space<vmem>>, vector<1x159x120xf32>
    %87 = vector.shape_cast %86 : vector<1x159x120xf32> to vector<159x120xf32>
    %cst_60 = arith.constant dense<0.000000e+00> : vector<1x120xf32>
    %88 = tpu.matmul %85, %87, %cst_60 {dimension_numbers = #tpu.dot_dimension_numbers<[1], [0], [0], [1], [0, 0, 1, 1], [], []>} : vector<1x159xf32>, vector<159x120xf32>, vector<1x120xf32> -> vector<1x120xf32>
    %89 = arith.addf %84, %88 : vector<1x120xf32>
    %90 = vector.extract_strided_slice %75 {offsets = [3, 0], sizes = [1, 159], strides = [1, 1]} : vector<5x159xf32> to vector<1x159xf32>
    %c3_61 = arith.constant 3 : index
    %c0_62 = arith.constant 0 : index
    %c0_63 = arith.constant 0 : index
    %91 = vector.load %arg8[%c3_61, %c0_62, %c0_63] : memref<5x159x120xf32, #tpu.memory_space<vmem>>, vector<1x159x120xf32>
    %92 = vector.shape_cast %91 : vector<1x159x120xf32> to vector<159x120xf32>
    %cst_64 = arith.constant dense<0.000000e+00> : vector<1x120xf32>
    %93 = tpu.matmul %90, %92, %cst_64 {dimension_numbers = #tpu.dot_dimension_numbers<[1], [0], [0], [1], [0, 0, 1, 1], [], []>} : vector<1x159xf32>, vector<159x120xf32>, vector<1x120xf32> -> vector<1x120xf32>
    %94 = arith.addf %89, %93 : vector<1x120xf32>
    %95 = vector.extract_strided_slice %75 {offsets = [4, 0], sizes = [1, 159], strides = [1, 1]} : vector<5x159xf32> to vector<1x159xf32>
    %c4_65 = arith.constant 4 : index
    %c0_66 = arith.constant 0 : index
    %c0_67 = arith.constant 0 : index
    %96 = vector.load %arg8[%c4_65, %c0_66, %c0_67] : memref<5x159x120xf32, #tpu.memory_space<vmem>>, vector<1x159x120xf32>
    %97 = vector.shape_cast %96 : vector<1x159x120xf32> to vector<159x120xf32>
    %cst_68 = arith.constant dense<0.000000e+00> : vector<1x120xf32>
    %98 = tpu.matmul %95, %97, %cst_68 {dimension_numbers = #tpu.dot_dimension_numbers<[1], [0], [0], [1], [0, 0, 1, 1], [], []>} : vector<1x159xf32>, vector<159x120xf32>, vector<1x120xf32> -> vector<1x120xf32>
    %99 = arith.addf %94, %98 : vector<1x120xf32>
    %c0_69 = arith.constant 0 : index
    %c0_70 = arith.constant 0 : index
    %100 = vector.load %arg9[%c0_69, %c0_70] : memref<1x120xf32, #tpu.memory_space<vmem>>, vector<1x120xf32>
    %101 = arith.addf %99, %100 : vector<1x120xf32>
    %cst_71 = arith.constant 0.000000e+00 : f32
    %102 = vector.broadcast %cst_71 : f32 to vector<1x120xf32>
    %103 = arith.maximumf %101, %102 : vector<1x120xf32>
    %c0_72 = arith.constant 0 : index
    %c0_73 = arith.constant 0 : index
    %104 = vector.load %arg10[%c0_72, %c0_73] : memref<120x84xf32, #tpu.memory_space<vmem>>, vector<120x84xf32>
    %cst_74 = arith.constant dense<0.000000e+00> : vector<1x84xf32>
    %105 = tpu.matmul %103, %104, %cst_74 {dimension_numbers = #tpu.dot_dimension_numbers<[1], [0], [0], [1], [0, 0, 1, 1], [], []>} : vector<1x120xf32>, vector<120x84xf32>, vector<1x84xf32> -> vector<1x84xf32>
    %c0_75 = arith.constant 0 : index
    %c0_76 = arith.constant 0 : index
    %106 = vector.load %arg11[%c0_75, %c0_76] : memref<1x84xf32, #tpu.memory_space<vmem>>, vector<1x84xf32>
    %107 = arith.addf %105, %106 : vector<1x84xf32>
    %cst_77 = arith.constant 0.000000e+00 : f32
    %108 = vector.broadcast %cst_77 : f32 to vector<1x84xf32>
    %109 = arith.maximumf %107, %108 : vector<1x84xf32>
    %c0_78 = arith.constant 0 : index
    %c0_79 = arith.constant 0 : index
    %110 = vector.load %arg12[%c0_78, %c0_79] : memref<84x128xf32, #tpu.memory_space<vmem>>, vector<84x128xf32>
    %cst_80 = arith.constant dense<0.000000e+00> : vector<1x128xf32>
    %111 = tpu.matmul %109, %110, %cst_80 {dimension_numbers = #tpu.dot_dimension_numbers<[1], [0], [0], [1], [0, 0, 1, 1], [], []>} : vector<1x84xf32>, vector<84x128xf32>, vector<1x128xf32> -> vector<1x128xf32>
    %c0_81 = arith.constant 0 : index
    %c0_82 = arith.constant 0 : index
    %112 = vector.load %arg13[%c0_81, %c0_82] : memref<1x128xf32, #tpu.memory_space<vmem>>, vector<1x128xf32>
    %113 = arith.addf %111, %112 : vector<1x128xf32>
    %c0_83 = arith.constant 0 : index
    %c0_84 = arith.constant 0 : index
    %c0_85 = arith.constant 0 : index
    %114 = vector.load %arg14[%c0_83, %c0_84, %c0_85] : memref<1x1x128xf32, #tpu.memory_space<vmem>>, vector<1x1x128xf32>
    %115 = vector.shape_cast %114 : vector<1x1x128xf32> to vector<1x128xf32>
    %116 = vector.shape_cast %113 : vector<1x128xf32> to vector<1x1x128xf32>
    tpu.vector_store %arg14[%c0_83, %c0_84, %c0_85], %116 {strides = array<i32>} : memref<1x1x128xf32, #tpu.memory_space<vmem>>, vector<1x1x128xf32>,
    return
  }
  func.func @transform_0(%arg0: i32) -> (i32, i32, i32) {
    %c0_i32 = arith.constant 0 : i32
    %c0_i32_0 = arith.constant 0 : i32
    %c0_i32_1 = arith.constant 0 : i32
    return %arg0, %c0_i32, %c0_i32_0 : i32, i32, i32
  }
  func.func @transform_1(%arg0: i32) -> (i32, i32, i32) {
    %c0_i32 = arith.constant 0 : i32
    %c0_i32_0 = arith.constant 0 : i32
    %c0_i32_1 = arith.constant 0 : i32
    %c0_i32_2 = arith.constant 0 : i32
    return %c0_i32, %c0_i32_0, %c0_i32_1 : i32, i32, i32
  }
  func.func @transform_2(%arg0: i32) -> (i32, i32) {
    %c0_i32 = arith.constant 0 : i32
    %c0_i32_0 = arith.constant 0 : i32
    %c0_i32_1 = arith.constant 0 : i32
    return %c0_i32, %c0_i32_0 : i32, i32
  }
  func.func @transform_3(%arg0: i32) -> (i32, i32) {
    %c0_i32 = arith.constant 0 : i32
    %c0_i32_0 = arith.constant 0 : i32
    %c0_i32_1 = arith.constant 0 : i32
    return %c0_i32, %c0_i32_0 : i32, i32
  }
  func.func @transform_4(%arg0: i32) -> (i32, i32, i32) {
    %c0_i32 = arith.constant 0 : i32
    %c0_i32_0 = arith.constant 0 : i32
    %c0_i32_1 = arith.constant 0 : i32
    %c0_i32_2 = arith.constant 0 : i32
    return %c0_i32, %c0_i32_0, %c0_i32_1 : i32, i32, i32
  }
  func.func @transform_5(%arg0: i32) -> (i32, i32) {
    %c0_i32 = arith.constant 0 : i32
    %c0_i32_0 = arith.constant 0 : i32
    %c0_i32_1 = arith.constant 0 : i32
    return %c0_i32, %c0_i32_0 : i32, i32
  }
  func.func @transform_6(%arg0: i32) -> (i32, i32) {
    %c0_i32 = arith.constant 0 : i32
    %c0_i32_0 = arith.constant 0 : i32
    %c0_i32_1 = arith.constant 0 : i32
    return %c0_i32, %c0_i32_0 : i32, i32
  }
  func.func @transform_7(%arg0: i32) -> (i32, i32, i32) {
    %c0_i32 = arith.constant 0 : i32
    %c0_i32_0 = arith.constant 0 : i32
    %c0_i32_1 = arith.constant 0 : i32
    %c0_i32_2 = arith.constant 0 : i32
    return %c0_i32, %c0_i32_0, %c0_i32_1 : i32, i32, i32
  }
  func.func @transform_8(%arg0: i32) -> (i32, i32) {
    %c0_i32 = arith.constant 0 : i32
    %c0_i32_0 = arith.constant 0 : i32
    %c0_i32_1 = arith.constant 0 : i32
    return %c0_i32, %c0_i32_0 : i32, i32
  }
  func.func @transform_9(%arg0: i32) -> (i32, i32) {
    %c0_i32 = arith.constant 0 : i32
    %c0_i32_0 = arith.constant 0 : i32
    %c0_i32_1 = arith.constant 0 : i32
    return %c0_i32, %c0_i32_0 : i32, i32
  }
  func.func @transform_10(%arg0: i32) -> (i32, i32) {
    %c0_i32 = arith.constant 0 : i32
    %c0_i32_0 = arith.constant 0 : i32
    %c0_i32_1 = arith.constant 0 : i32
    return %c0_i32, %c0_i32_0 : i32, i32
  }
  func.func @transform_11(%arg0: i32) -> (i32, i32) {
    %c0_i32 = arith.constant 0 : i32
    %c0_i32_0 = arith.constant 0 : i32
    %c0_i32_1 = arith.constant 0 : i32
    return %c0_i32, %c0_i32_0 : i32, i32
  }
  func.func @transform_12(%arg0: i32) -> (i32, i32) {
    %c0_i32 = arith.constant 0 : i32
    %c0_i32_0 = arith.constant 0 : i32
    %c0_i32_1 = arith.constant 0 : i32
    return %c0_i32, %c0_i32_0 : i32, i32
  }
  func.func @transform_13(%arg0: i32) -> (i32, i32, i32) {
    %c0_i32 = arith.constant 0 : i32
    %c0_i32_0 = arith.constant 0 : i32
    %c0_i32_1 = arith.constant 0 : i32
    return %arg0, %c0_i32, %c0_i32_0 : i32, i32, i32
  }
}

</mosaic_0001>

<llo_original>
// kernel: lenet5_forward.1
$region0: #{lenet5_forward.1}
  #allocation0 [shape = 'u32[]', space=smem, size = 0x4, offset = 0x4, fixed_abs, tag = 'smem constant byte address 0x4 - core index']
  #allocation1 [shape = 'u32[72,128]{1,0:T(1,128)}', space=vmem, size = 0x9000, scoped, tag = 'internal scratch']
  %s0 = inlined_call_operand.vmem [shape: f32[2,32,32], index: 0, kind: input, shape index: {}]
  %s1 = inlined_call_operand.vmem [shape: f32[5,32,168], index: 1, kind: input, shape index: {}]
  %s2 = inlined_call_operand.vmem [shape: f32[1,168], index: 2, kind: input, shape index: {}]
  %s3 = inlined_call_operand.vmem [shape: f32[14,27], index: 3, kind: input, shape index: {}]
  %s4 = inlined_call_operand.vmem [shape: f32[5,167,160], index: 4, kind: input, shape index: {}]
  %s5 = inlined_call_operand.vmem [shape: f32[1,160], index: 5, kind: input, shape index: {}]
  %s6 = inlined_call_operand.vmem [shape: f32[5,9], index: 6, kind: input, shape index: {}]
  %s7 = inlined_call_operand.vmem [shape: f32[5,159,120], index: 7, kind: input, shape index: {}]
  %s8 = inlined_call_operand.vmem [shape: f32[1,120], index: 8, kind: input, shape index: {}]
  %s9 = inlined_call_operand.vmem [shape: f32[120,84], index: 9, kind: input, shape index: {}]
  %s10 = inlined_call_operand.vmem [shape: f32[1,84], index: 10, kind: input, shape index: {}]
  %s11 = inlined_call_operand.vmem [shape: f32[84,128], index: 11, kind: input, shape index: {}]
  %s12 = inlined_call_operand.vmem [shape: f32[1,128], index: 12, kind: input, shape index: {}]
  %s13 = inlined_call_operand.hbm [shape: f32[2,1,128], index: 13, kind: output, shape index: {}]
  %s14 = sld [smem:[#allocation0]]
  $region85: #{lenet5_forward.1} parent=0
    _
  %s16 = ssub.s32 1, %s14
  %s17 = scalar_select 0, %s16, %s14
  $region1: #{lenet5_forward.1} parent=0
    #allocation2 [shape = 'u8[1024]{0}', space=vmem, size = 0x400, scoped, tag = 'output window, operand 0']
    #allocation3 [shape = 's32[2]{0}', space=sflag, size = 0x8, scoped, tag = 'scoped memory for lenet5_forward.1']
    %18 = vsyncpa [#allocation3], 0
    %s19 = scalar_lea.sflag [#allocation3], 1
    %20 = vsyncpa %s19, 0
    loop: start=0, step=1, limit=4
    $region2: #{lenet5_forward.1} parent=1 // loop_pre_header
      _
    $region3: #{lenet5_forward.1} parent=1 // loop_header
      %s22 = sphi 0, %s26
      %p23 = scmp.ge.s32.totalorder %s22, 4
      %s32 = sphi 0, %s34
      %s35 = sphi 0, %s32
      %s36 = sphi 0, %s35
      %s52 = sphi 0, %s36
      %s56 = sphi 0, %s56
      %s58 = sphi 0, %s56
      %s59 = sphi 0, %s58
      %s73 = sphi 0, %s59
      %s77 = sphi 0, %s77
      %s79 = sphi 0, %s77
      %s80 = sphi 0, %s79
      %s94 = sphi 0, %s80
      %s98 = sphi 0, %s98
      %s100 = sphi 0, %s98
      %s101 = sphi 0, %s100
      %s115 = sphi 0, %s101
      %s119 = sphi 0, %s119
      %s121 = sphi 0, %s119
      %s122 = sphi 0, %s121
      %s136 = sphi 0, %s122
      %s140 = sphi 0, %s140
      %s142 = sphi 0, %s140
      %s143 = sphi 0, %s142
      %s157 = sphi 0, %s143
      %s161 = sphi 0, %s161
      %s163 = sphi 0, %s161
      %s164 = sphi 0, %s163
      %s178 = sphi 0, %s164
      %s182 = sphi 0, %s182
      %s184 = sphi 0, %s182
      %s185 = sphi 0, %s184
      %s199 = sphi 0, %s185
      %s203 = sphi 0, %s203
      %s205 = sphi 0, %s203
      %s206 = sphi 0, %s205
      %s220 = sphi 0, %s206
      %s224 = sphi 0, %s224
      %s226 = sphi 0, %s224
      %s227 = sphi 0, %s226
      %s241 = sphi 0, %s227
      %s245 = sphi 0, %s245
      %s247 = sphi 0, %s245
      %s248 = sphi 0, %s247
      %s262 = sphi 0, %s248
      %s266 = sphi 0, %s266
      %s268 = sphi 0, %s266
      %s269 = sphi 0, %s268
      %s283 = sphi 0, %s269
      %s287 = sphi 0, %s287
      %s289 = sphi 0, %s287
      %s290 = sphi 0, %s289
      %s304 = sphi 0, %s290
      %s310 = sphi 0, %s312
      %s313 = sphi 0, %s310
      %s314 = sphi 0, %s313
      %s330 = sphi 0, %s314
    $region4: #{lenet5_forward.1} parent=1 // loop_header_branch
      %25 = sbr.rel (%p23) target = $region8
    $region5: #{lenet5_forward.1} parent=1 // loop_body
      %s27 = ssub.s32 %s22, 1
      %s28 = ssub.s32 %s22, 2
      %s29 = sadd.s32 %s22, 1
      %s30 = ssub.s32 %s22, %s29
      %p31 = scmp.eq.s32.totalorder %s30, 0
      %s33 = sadd.s32 %s32, 1
      %s34 = scalar_select %p31, %s32, %s33
      %p37 = pneg %p31
      %p38 = scmp.eq.s32.totalorder %s22, 1
      %p39 = por %p37, %p38
      %p40 = scmp.ne.s32.totalorder %s32, %s35
      %p41 = scmp.eq.s32.totalorder %s22, 0
      %p42 = por %p40, %p41
      %p43 = scmp.ne.s32.totalorder %s32, %s35
      %p44 = scmp.eq.s32.totalorder %s27, 1
      %p45 = por %p43, %p44
      %p46 = scmp.ne.s32.totalorder %s35, %s36
      %p47 = scmp.eq.s32.totalorder %s27, 0
      %p48 = por %p46, %p47
      %p49 = scmp.ne.s32.totalorder %s35, %s36
      %p50 = scmp.eq.s32.totalorder %s28, 1
      %p51 = por %p49, %p50
      %p53 = scmp.ne.s32.totalorder %s36, %s52
      %p54 = scmp.eq.s32.totalorder %s28, 0
      %p55 = por %p53, %p54
      %s57 = sadd.s32 %s56, 1
      %p60 = scmp.eq.s32.totalorder %s22, 1
      %p61 = scmp.ne.s32.totalorder %s56, %s58
      %p62 = scmp.eq.s32.totalorder %s22, 0
      %p63 = por %p61, %p62
      %p64 = scmp.ne.s32.totalorder %s56, %s58
      %p65 = scmp.eq.s32.totalorder %s27, 1
      %p66 = por %p64, %p65
      %p67 = scmp.ne.s32.totalorder %s58, %s59
      %p68 = scmp.eq.s32.totalorder %s27, 0
      %p69 = por %p67, %p68
      %p70 = scmp.ne.s32.totalorder %s58, %s59
      %p71 = scmp.eq.s32.totalorder %s28, 1
      %p72 = por %p70, %p71
      %p74 = scmp.ne.s32.totalorder %s59, %s73
      %p75 = scmp.eq.s32.totalorder %s28, 0
      %p76 = por %p74, %p75
      %s78 = sadd.s32 %s77, 1
      %p81 = scmp.eq.s32.totalorder %s22, 1
      %p82 = scmp.ne.s32.totalorder %s77, %s79
      %p83 = scmp.eq.s32.totalorder %s22, 0
      %p84 = por %p82, %p83
      %p85 = scmp.ne.s32.totalorder %s77, %s79
      %p86 = scmp.eq.s32.totalorder %s27, 1
      %p87 = por %p85, %p86
      %p88 = scmp.ne.s32.totalorder %s79, %s80
      %p89 = scmp.eq.s32.totalorder %s27, 0
      %p90 = por %p88, %p89
      %p91 = scmp.ne.s32.totalorder %s79, %s80
      %p92 = scmp.eq.s32.totalorder %s28, 1
      %p93 = por %p91, %p92
      %p95 = scmp.ne.s32.totalorder %s80, %s94
      %p96 = scmp.eq.s32.totalorder %s28, 0
      %p97 = por %p95, %p96
      %s99 = sadd.s32 %s98, 1
      %p102 = scmp.eq.s32.totalorder %s22, 1
      %p103 = scmp.ne.s32.totalorder %s98, %s100
      %p104 = scmp.eq.s32.totalorder %s22, 0
      %p105 = por %p103, %p104
      %p106 = scmp.ne.s32.totalorder %s98, %s100
      %p107 = scmp.eq.s32.totalorder %s27, 1
      %p108 = por %p106, %p107
      %p109 = scmp.ne.s32.totalorder %s100, %s101
      %p110 = scmp.eq.s32.totalorder %s27, 0
      %p111 = por %p109, %p110
      %p112 = scmp.ne.s32.totalorder %s100, %s101
      %p113 = scmp.eq.s32.totalorder %s28, 1
      %p114 = por %p112, %p113
      %p116 = scmp.ne.s32.totalorder %s101, %s115
      %p117 = scmp.eq.s32.totalorder %s28, 0
      %p118 = por %p116, %p117
      %s120 = sadd.s32 %s119, 1
      %p123 = scmp.eq.s32.totalorder %s22, 1
      %p124 = scmp.ne.s32.totalorder %s119, %s121
      %p125 = scmp.eq.s32.totalorder %s22, 0
      %p126 = por %p124, %p125
      %p127 = scmp.ne.s32.totalorder %s119, %s121
      %p128 = scmp.eq.s32.totalorder %s27, 1
      %p129 = por %p127, %p128
      %p130 = scmp.ne.s32.totalorder %s121, %s122
      %p131 = scmp.eq.s32.totalorder %s27, 0
      %p132 = por %p130, %p131
      %p133 = scmp.ne.s32.totalorder %s121, %s122
      %p134 = scmp.eq.s32.totalorder %s28, 1
      %p135 = por %p133, %p134
      %p137 = scmp.ne.s32.totalorder %s122, %s136
      %p138 = scmp.eq.s32.totalorder %s28, 0
      %p139 = por %p137, %p138
      %s141 = sadd.s32 %s140, 1
      %p144 = scmp.eq.s32.totalorder %s22, 1
      %p145 = scmp.ne.s32.totalorder %s140, %s142
      %p146 = scmp.eq.s32.totalorder %s22, 0
      %p147 = por %p145, %p146
      %p148 = scmp.ne.s32.totalorder %s140, %s142
      %p149 = scmp.eq.s32.totalorder %s27, 1
      %p150 = por %p148, %p149
      %p151 = scmp.ne.s32.totalorder %s142, %s143
      %p152 = scmp.eq.s32.totalorder %s27, 0
      %p153 = por %p151, %p152
      %p154 = scmp.ne.s32.totalorder %s142, %s143
      %p155 = scmp.eq.s32.totalorder %s28, 1
      %p156 = por %p154, %p155
      %p158 = scmp.ne.s32.totalorder %s143, %s157
      %p159 = scmp.eq.s32.totalorder %s28, 0
      %p160 = por %p158, %p159
      %s162 = sadd.s32 %s161, 1
      %p165 = scmp.eq.s32.totalorder %s22, 1
      %p166 = scmp.ne.s32.totalorder %s161, %s163
      %p167 = scmp.eq.s32.totalorder %s22, 0
      %p168 = por %p166, %p167
      %p169 = scmp.ne.s32.totalorder %s161, %s163
      %p170 = scmp.eq.s32.totalorder %s27, 1
      %p171 = por %p169, %p170
      %p172 = scmp.ne.s32.totalorder %s163, %s164
      %p173 = scmp.eq.s32.totalorder %s27, 0
      %p174 = por %p172, %p173
      %p175 = scmp.ne.s32.totalorder %s163, %s164
      %p176 = scmp.eq.s32.totalorder %s28, 1
      %p177 = por %p175, %p176
      %p179 = scmp.ne.s32.totalorder %s164, %s178
      %p180 = scmp.eq.s32.totalorder %s28, 0
      %p181 = por %p179, %p180
      %s183 = sadd.s32 %s182, 1
      %p186 = scmp.eq.s32.totalorder %s22, 1
      %p187 = scmp.ne.s32.totalorder %s182, %s184
      %p188 = scmp.eq.s32.totalorder %s22, 0
      %p189 = por %p187, %p188
      %p190 = scmp.ne.s32.totalorder %s182, %s184
      %p191 = scmp.eq.s32.totalorder %s27, 1
      %p192 = por %p190, %p191
      %p193 = scmp.ne.s32.totalorder %s184, %s185
      %p194 = scmp.eq.s32.totalorder %s27, 0
      %p195 = por %p193, %p194
      %p196 = scmp.ne.s32.totalorder %s184, %s185
      %p197 = scmp.eq.s32.totalorder %s28, 1
      %p198 = por %p196, %p197
      %p200 = scmp.ne.s32.totalorder %s185, %s199
      %p201 = scmp.eq.s32.totalorder %s28, 0
      %p202 = por %p200, %p201
      %s204 = sadd.s32 %s203, 1
      %p207 = scmp.eq.s32.totalorder %s22, 1
      %p208 = scmp.ne.s32.totalorder %s203, %s205
      %p209 = scmp.eq.s32.totalorder %s22, 0
      %p210 = por %p208, %p209
      %p211 = scmp.ne.s32.totalorder %s203, %s205
      %p212 = scmp.eq.s32.totalorder %s27, 1
      %p213 = por %p211, %p212
      %p214 = scmp.ne.s32.totalorder %s205, %s206
      %p215 = scmp.eq.s32.totalorder %s27, 0
      %p216 = por %p214, %p215
      %p217 = scmp.ne.s32.totalorder %s205, %s206
      %p218 = scmp.eq.s32.totalorder %s28, 1
      %p219 = por %p217, %p218
      %p221 = scmp.ne.s32.totalorder %s206, %s220
      %p222 = scmp.eq.s32.totalorder %s28, 0
      %p223 = por %p221, %p222
      %s225 = sadd.s32 %s224, 1
      %p228 = scmp.eq.s32.totalorder %s22, 1
      %p229 = scmp.ne.s32.totalorder %s224, %s226
      %p230 = scmp.eq.s32.totalorder %s22, 0
      %p231 = por %p229, %p230
      %p232 = scmp.ne.s32.totalorder %s224, %s226
      %p233 = scmp.eq.s32.totalorder %s27, 1
      %p234 = por %p232, %p233
      %p235 = scmp.ne.s32.totalorder %s226, %s227
      %p236 = scmp.eq.s32.totalorder %s27, 0
      %p237 = por %p235, %p236
      %p238 = scmp.ne.s32.totalorder %s226, %s227
      %p239 = scmp.eq.s32.totalorder %s28, 1
      %p240 = por %p238, %p239
      %p242 = scmp.ne.s32.totalorder %s227, %s241
      %p243 = scmp.eq.s32.totalorder %s28, 0
      %p244 = por %p242, %p243
      %s246 = sadd.s32 %s245, 1
      %p249 = scmp.eq.s32.totalorder %s22, 1
      %p250 = scmp.ne.s32.totalorder %s245, %s247
      %p251 = scmp.eq.s32.totalorder %s22, 0
      %p252 = por %p250, %p251
      %p253 = scmp.ne.s32.totalorder %s245, %s247
      %p254 = scmp.eq.s32.totalorder %s27, 1
      %p255 = por %p253, %p254
      %p256 = scmp.ne.s32.totalorder %s247, %s248
      %p257 = scmp.eq.s32.totalorder %s27, 0
      %p258 = por %p256, %p257
      %p259 = scmp.ne.s32.totalorder %s247, %s248
      %p260 = scmp.eq.s32.totalorder %s28, 1
      %p261 = por %p259, %p260
      %p263 = scmp.ne.s32.totalorder %s248, %s262
      %p264 = scmp.eq.s32.totalorder %s28, 0
      %p265 = por %p263, %p264
      %s267 = sadd.s32 %s266, 1
      %p270 = scmp.eq.s32.totalorder %s22, 1
      %p271 = scmp.ne.s32.totalorder %s266, %s268
      %p272 = scmp.eq.s32.totalorder %s22, 0
      %p273 = por %p271, %p272
      %p274 = scmp.ne.s32.totalorder %s266, %s268
      %p275 = scmp.eq.s32.totalorder %s27, 1
      %p276 = por %p274, %p275
      %p277 = scmp.ne.s32.totalorder %s268, %s269
      %p278 = scmp.eq.s32.totalorder %s27, 0
      %p279 = por %p277, %p278
      %p280 = scmp.ne.s32.totalorder %s268, %s269
      %p281 = scmp.eq.s32.totalorder %s28, 1
      %p282 = por %p280, %p281
      %p284 = scmp.ne.s32.totalorder %s269, %s283
      %p285 = scmp.eq.s32.totalorder %s28, 0
      %p286 = por %p284, %p285
      %s288 = sadd.s32 %s287, 1
      %p291 = scmp.eq.s32.totalorder %s22, 1
      %p292 = scmp.ne.s32.totalorder %s287, %s289
      %p293 = scmp.eq.s32.totalorder %s22, 0
      %p294 = por %p292, %p293
      %p295 = scmp.ne.s32.totalorder %s287, %s289
      %p296 = scmp.eq.s32.totalorder %s27, 1
      %p297 = por %p295, %p296
      %p298 = scmp.ne.s32.totalorder %s289, %s290
      %p299 = scmp.eq.s32.totalorder %s27, 0
      %p300 = por %p298, %p299
      %p301 = scmp.ne.s32.totalorder %s289, %s290
      %p302 = scmp.eq.s32.totalorder %s28, 1
      %p303 = por %p301, %p302
      %p305 = scmp.ne.s32.totalorder %s290, %s304
      %p306 = scmp.eq.s32.totalorder %s28, 0
      %p307 = por %p305, %p306
      %s308 = ssub.s32 %s22, %s29
      %p309 = scmp.eq.s32.totalorder %s308, 0
      %s311 = sadd.s32 %s310, 1
      %s312 = scalar_select %p309, %s310, %s311
      %p315 = pneg %p309
      %p316 = scmp.eq.s32.totalorder %s22, 1
      %p317 = por %p315, %p316
      %p318 = scmp.ne.s32.totalorder %s310, %s313
      %p319 = scmp.eq.s32.totalorder %s22, 0
      %p320 = por %p318, %p319
      %p321 = scmp.ne.s32.totalorder %s310, %s313
      %p322 = scmp.eq.s32.totalorder %s27, 1
      %p323 = por %p321, %p322
      %p324 = scmp.ne.s32.totalorder %s313, %s314
      %p325 = scmp.eq.s32.totalorder %s27, 0
      %p326 = por %p324, %p325
      %p327 = scmp.ne.s32.totalorder %s313, %s314
      %p328 = scmp.eq.s32.totalorder %s28, 1
      %p329 = por %p327, %p328
      %p331 = scmp.ne.s32.totalorder %s314, %s330
      %p332 = scmp.eq.s32.totalorder %s28, 0
      %p333 = por %p331, %p332
      %p334 = scmp.le.s32.totalorder 1, %s22
      %p335 = scmp.lt.s32.totalorder %s22, 3
      %p336 = pnand %p334, %p335
      %p337 = pneg %p336
      // Predicated region
      $region9: #{lenet5_forward.1} parent=5 // pred_check
        _
      $region10: #{lenet5_forward.1} parent=5 // pred_check_branch
        %339 = sbr.rel (%p336) target = $region12
      $region11: #{lenet5_forward.1} parent=5 // pred_region
        %s340 = ssub.s32 %s22, 1
        // Predicated region
        $region13: #{lenet5_forward.1} parent=11 // pred_check
          %p341 = pneg %p69
        $region14: #{lenet5_forward.1} parent=11 // pred_check_branch
          %343 = sbr.rel (%p341) target = $region16
        $region15: #{lenet5_forward.1} parent=11 // pred_region
          _
        $region16: #{lenet5_forward.1} parent=11 // pred_fallthru
          _
        // Predicated region
        $region17: #{lenet5_forward.1} parent=11 // pred_check
          %p344 = pneg %p90
        $region18: #{lenet5_forward.1} parent=11 // pred_check_branch
          %346 = sbr.rel (%p344) target = $region20
        $region19: #{lenet5_forward.1} parent=11 // pred_region
          _
        $region20: #{lenet5_forward.1} parent=11 // pred_fallthru
          _
        // Predicated region
        $region21: #{lenet5_forward.1} parent=11 // pred_check
          %p347 = pneg %p111
        $region22: #{lenet5_forward.1} parent=11 // pred_check_branch
          %349 = sbr.rel (%p347) target = $region24
        $region23: #{lenet5_forward.1} parent=11 // pred_region
          _
        $region24: #{lenet5_forward.1} parent=11 // pred_fallthru
          _
        // Predicated region
        $region25: #{lenet5_forward.1} parent=11 // pred_check
          %p350 = pneg %p132
        $region26: #{lenet5_forward.1} parent=11 // pred_check_branch
          %352 = sbr.rel (%p350) target = $region28
        $region27: #{lenet5_forward.1} parent=11 // pred_region
          _
        $region28: #{lenet5_forward.1} parent=11 // pred_fallthru
          _
        // Predicated region
        $region29: #{lenet5_forward.1} parent=11 // pred_check
          %p353 = pneg %p153
        $region30: #{lenet5_forward.1} parent=11 // pred_check_branch
          %355 = sbr.rel (%p353) target = $region32
        $region31: #{lenet5_forward.1} parent=11 // pred_region
          _
        $region32: #{lenet5_forward.1} parent=11 // pred_fallthru
          _
        // Predicated region
        $region33: #{lenet5_forward.1} parent=11 // pred_check
          %p356 = pneg %p174
        $region34: #{lenet5_forward.1} parent=11 // pred_check_branch
          %358 = sbr.rel (%p356) target = $region36
        $region35: #{lenet5_forward.1} parent=11 // pred_region
          _
        $region36: #{lenet5_forward.1} parent=11 // pred_fallthru
          _
        // Predicated region
        $region37: #{lenet5_forward.1} parent=11 // pred_check
          %p359 = pneg %p195
        $region38: #{lenet5_forward.1} parent=11 // pred_check_branch
          %361 = sbr.rel (%p359) target = $region40
        $region39: #{lenet5_forward.1} parent=11 // pred_region
          _
        $region40: #{lenet5_forward.1} parent=11 // pred_fallthru
          _
        // Predicated region
        $region41: #{lenet5_forward.1} parent=11 // pred_check
          %p362 = pneg %p216
        $region42: #{lenet5_forward.1} parent=11 // pred_check_branch
          %364 = sbr.rel (%p362) target = $region44
        $region43: #{lenet5_forward.1} parent=11 // pred_region
          _
        $region44: #{lenet5_forward.1} parent=11 // pred_fallthru
          _
        // Predicated region
        $region45: #{lenet5_forward.1} parent=11 // pred_check
          %p365 = pneg %p237
        $region46: #{lenet5_forward.1} parent=11 // pred_check_branch
          %367 = sbr.rel (%p365) target = $region48
        $region47: #{lenet5_forward.1} parent=11 // pred_region
          _
        $region48: #{lenet5_forward.1} parent=11 // pred_fallthru
          _
        // Predicated region
        $region49: #{lenet5_forward.1} parent=11 // pred_check
          %p368 = pneg %p258
        $region50: #{lenet5_forward.1} parent=11 // pred_check_branch
          %370 = sbr.rel (%p368) target = $region52
        $region51: #{lenet5_forward.1} parent=11 // pred_region
          _
        $region52: #{lenet5_forward.1} parent=11 // pred_fallthru
          _
        // Predicated region
        $region53: #{lenet5_forward.1} parent=11 // pred_check
          %p371 = pneg %p279
        $region54: #{lenet5_forward.1} parent=11 // pred_check_branch
          %373 = sbr.rel (%p371) target = $region56
        $region55: #{lenet5_forward.1} parent=11 // pred_region
          _
        $region56: #{lenet5_forward.1} parent=11 // pred_fallthru
          _
        // Predicated region
        $region57: #{lenet5_forward.1} parent=11 // pred_check
          %p374 = pneg %p300
        $region58: #{lenet5_forward.1} parent=11 // pred_check_branch
          %376 = sbr.rel (%p374) target = $region60
        $region59: #{lenet5_forward.1} parent=11 // pred_region
          _
        $region60: #{lenet5_forward.1} parent=11 // pred_fallthru
          _
      $region12: #{lenet5_forward.1} parent=5 // pred_fallthru
        _
      %p377 = scmp.lt.s32.totalorder %s22, 2
      // Predicated region
      $region61: #{lenet5_forward.1} parent=5 // pred_check
        %p378 = pneg %p377
      $region62: #{lenet5_forward.1} parent=5 // pred_check_branch
        %380 = sbr.rel (%p378) target = $region64
      $region63: #{lenet5_forward.1} parent=5 // pred_region
        // Predicated region
        $region65: #{lenet5_forward.1} parent=63 // pred_check
          %p381 = pneg %p42
        $region66: #{lenet5_forward.1} parent=63 // pred_check_branch
          %383 = sbr.rel (%p381) target = $region68
        $region67: #{lenet5_forward.1} parent=63 // pred_region
          %p384 = scmp.lt.s32.totalorder %s22, 1
          %s385 = scalar_select %p384, %s22, 1
          %s386 = smul.addr %s385, 4
          %s387 = smul.addr %s386, 8
          %s388 = scalar_lea.vmem %s0, %s387
        $region68: #{lenet5_forward.1} parent=63 // pred_fallthru
          _
      $region64: #{lenet5_forward.1} parent=5 // pred_fallthru
        _
      %p389 = scmp.le.s32.totalorder 1, %s22
      %p390 = scmp.lt.s32.totalorder %s22, 3
      %p391 = pnand %p389, %p390
      %p392 = pneg %p391
      // Predicated region
      $region69: #{lenet5_forward.1} parent=5 // pred_check
        _
      $region70: #{lenet5_forward.1} parent=5 // pred_check_branch
        %394 = sbr.rel (%p391) target = $region72
      $region71: #{lenet5_forward.1} parent=5 // pred_region
        %s395 = ssub.s32 %s22, 1
        %p396 = scmp.lt.s32.totalorder %s27, 1
        %s397 = scalar_select %p396, %s27, 1
        %s398 = smul.addr %s397, 4
        %s399 = smul.addr %s398, 8
        %s400 = scalar_lea.vmem %s0, %s399
        %p401 = pneg %p48
        %p402 = pneg %p45
        %p403 = pneg %p69
        %p404 = pneg %p66
        %p405 = pneg %p90
        %p406 = pneg %p87
        %p407 = pneg %p111
        %p408 = pneg %p108
        %p409 = pneg %p132
        %p410 = pneg %p129
        %p411 = pneg %p153
        %p412 = pneg %p150
        %p413 = pneg %p174
        %p414 = pneg %p171
        %p415 = pneg %p195
        %p416 = pneg %p192
        %p417 = pneg %p216
        %p418 = pneg %p213
        %p419 = pneg %p237
        %p420 = pneg %p234
        %p421 = pneg %p258
        %p422 = pneg %p255
        %p423 = pneg %p279
        %p424 = pneg %p276
        %p425 = pneg %p300
        %p426 = pneg %p297
        %p427 = pneg %p326
        %p428 = pneg %p323
        %s429 = sand.u32 %s313, 1
        %s430 = scalar_lea.sflag [#allocation3], %s429
        %s431 = sand.u32 %s313, 1
        %s432 = scalar_lea.vmem [#allocation2], %s431
        %p433 = scmp.lt.s32.totalorder %s27, 1
        %s434 = scalar_select %p433, %s27, 1
        %s435 = smul.addr %s434, 4
        %s436 = smul.addr %s435, 8
        %s437 = scalar_lea.vmem %s0, %s436
        %v438 = vld [vmem:[%s437] sm:$0xff]
        %v439 = vld [vmem:[%s437 + $0x8] sm:$0xff]
        %v440 = vld [vmem:[%s437 + $0x10] sm:$0xff]
        %v441 = vld [vmem:[%s437 + $0x18] sm:$0xff]
        %v442 = vld [vmem:[%s1] sm:$0xff]
        %v443 = vld [vmem:[%s1 + $0x8] sm:$0xff]
        %v444 = vld [vmem:[%s1 + $0x10] sm:$0xff]
        %v445 = vld [vmem:[%s1 + $0x18] sm:$0xff]
        %v446 = vld [vmem:[%s1 + $0x20] sm:$0xff]
        %v447 = vld [vmem:[%s1 + $0x28] sm:$0xff]
        %v448 = vld [vmem:[%s1 + $0x30] sm:$0xff]
        %v449 = vld [vmem:[%s1 + $0x38] sm:$0xff]
        %s450 = scalar_lea.vmem %s1, 64
        %v451 = vld [vmem:[%s450] sm:$0xff]
        %v452 = vld [vmem:[%s450 + $0x8] sm:$0xff]
        %v453 = vld [vmem:[%s450 + $0x10] sm:$0xff]
        %v454 = vld [vmem:[%s450 + $0x18] sm:$0xff]
        %v455 = vld [vmem:[%s450 + $0x20] sm:$0xff]
        %v456 = vld [vmem:[%s450 + $0x28] sm:$0xff]
        %v457 = vld [vmem:[%s450 + $0x30] sm:$0xff]
        %v458 = vld [vmem:[%s450 + $0x38] sm:$0xff]
        %vm463 = vcmask 1046528
        %v464 = vrot.slane %v438, 1
        %v465 = vrot.slane %v439, 1
        %v466 = vsel %vm463, %v464, %v465
        %v467 = vrot.slane %v440, 1
        %v468 = vsel %vm463, %v465, %v467
        %v469 = vrot.slane %v441, 1
        %v470 = vsel %vm463, %v467, %v469
        %vm471 = vcmask 261120
        %v472 = vsel %vm471, %v466, 0
        %v474 = vsel %vm471, %v468, 0
        %v476 = vsel %vm471, %v470, 0
        %v478 = vsel %vm471, %v469, 0
        %480 = vmatpush.msra.mxu0 0.0
        %481 = vmatpush.msra.mxu0 0.0
        %482 = vmatpush.msra.mxu0 0.0
        %483 = vmatpush.msra.mxu0 0.0
        %484 = vmatpush.msra.mxu0 0.0
        %485 = vmatpush.msra.mxu0 0.0
        %486 = vmatpush.msra.mxu0 0.0
        %487 = vmatpush.msra.mxu0 0.0
        %488 = vmatpush.msra.mxu0 0.0
        %489 = vmatpush.msra.mxu0 0.0
        %490 = vmatpush.msra.mxu0 0.0
        %491 = vmatpush.msra.mxu0 0.0
        %492 = vmatpush.msra.mxu0 %v457
        %493 = vmatpush.msra.mxu0 %v455
        %494 = vmatpush.msra.mxu0 %v453
        %495 = vmatpush.msra.mxu0 %v451
        %496 = vmatmul.f32.gmra.mxu0 %v472
        %v497 = vpop.f32.mrf.mxu0
        %v498 = vadd.f32 0.0, %v497
        %499 = vmatmul.f32.gmra.mxu0 %v474
        %v500 = vpop.f32.mrf.mxu0
        %v501 = vadd.f32 0.0, %v500
        %502 = vmatmul.f32.gmra.mxu0 %v476
        %v503 = vpop.f32.mrf.mxu0
        %v504 = vadd.f32 0.0, %v503
        %505 = vmatmul.f32.gmra.mxu0 %v478
        %v506 = vpop.f32.mrf.mxu0
        %v507 = vadd.f32 0.0, %v506
        %508 = vdwg.mxu0
        %509 = vmatpush.msra.mxu0 0.0
        %510 = vmatpush.msra.mxu0 0.0
        %511 = vmatpush.msra.mxu0 0.0
        %512 = vmatpush.msra.mxu0 0.0
        %513 = vmatpush.msra.mxu0 0.0
        %514 = vmatpush.msra.mxu0 0.0
        %515 = vmatpush.msra.mxu0 0.0
        %516 = vmatpush.msra.mxu0 0.0
        %517 = vmatpush.msra.mxu0 0.0
        %518 = vmatpush.msra.mxu0 0.0
        %519 = vmatpush.msra.mxu0 0.0
        %520 = vmatpush.msra.mxu0 0.0
        %521 = vmatpush.msra.mxu0 %v458
        %522 = vmatpush.msra.mxu0 %v456
        %523 = vmatpush.msra.mxu0 %v454
        %524 = vmatpush.msra.mxu0 %v452
        %525 = vmatmul.f32.gmra.mxu0 %v472
        %v526 = vpop.f32.mrf.mxu0
        %v527 = vadd.f32 0.0, %v526
        %528 = vmatmul.f32.gmra.mxu0 %v474
        %v529 = vpop.f32.mrf.mxu0
        %v530 = vadd.f32 0.0, %v529
        %531 = vmatmul.f32.gmra.mxu0 %v476
        %v532 = vpop.f32.mrf.mxu0
        %v533 = vadd.f32 0.0, %v532
        %534 = vmatmul.f32.gmra.mxu0 %v478
        %v535 = vpop.f32.mrf.mxu0
        %v536 = vadd.f32 0.0, %v535
        %537 = vdwg.mxu0
        %v538 = vsel %vm471, %v438, 0
        %v540 = vsel %vm471, %v439, 0
        %v542 = vsel %vm471, %v440, 0
        %v544 = vsel %vm471, %v441, 0
        %546 = vmatpush.msra.mxu0 0.0
        %547 = vmatpush.msra.mxu0 0.0
        %548 = vmatpush.msra.mxu0 0.0
        %549 = vmatpush.msra.mxu0 0.0
        %550 = vmatpush.msra.mxu0 0.0
        %551 = vmatpush.msra.mxu0 0.0
        %552 = vmatpush.msra.mxu0 0.0
        %553 = vmatpush.msra.mxu0 0.0
        %554 = vmatpush.msra.mxu0 0.0
        %555 = vmatpush.msra.mxu0 0.0
        %556 = vmatpush.msra.mxu0 0.0
        %557 = vmatpush.msra.mxu0 0.0
        %558 = vmatpush.msra.mxu0 %v448
        %559 = vmatpush.msra.mxu0 %v446
        %560 = vmatpush.msra.mxu0 %v444
        %561 = vmatpush.msra.mxu0 %v442
        %562 = vmatmul.f32.gmra.mxu0 %v538
        %v563 = vpop.f32.mrf.mxu0
        %v564 = vadd.f32 %v498, %v563
        %565 = vmatmul.f32.gmra.mxu0 %v540
        %v566 = vpop.f32.mrf.mxu0
        %v567 = vadd.f32 %v501, %v566
        %568 = vmatmul.f32.gmra.mxu0 %v542
        %v569 = vpop.f32.mrf.mxu0
        %v570 = vadd.f32 %v504, %v569
        %571 = vmatmul.f32.gmra.mxu0 %v544
        %v572 = vpop.f32.mrf.mxu0
        %v573 = vadd.f32 %v507, %v572
        %574 = vdwg.mxu0
        %575 = vmatpush.msra.mxu0 0.0
        %576 = vmatpush.msra.mxu0 0.0
        %577 = vmatpush.msra.mxu0 0.0
        %578 = vmatpush.msra.mxu0 0.0
        %579 = vmatpush.msra.mxu0 0.0
        %580 = vmatpush.msra.mxu0 0.0
        %581 = vmatpush.msra.mxu0 0.0
        %582 = vmatpush.msra.mxu0 0.0
        %583 = vmatpush.msra.mxu0 0.0
        %584 = vmatpush.msra.mxu0 0.0
        %585 = vmatpush.msra.mxu0 0.0
        %586 = vmatpush.msra.mxu0 0.0
        %587 = vmatpush.msra.mxu0 %v449
        %588 = vmatpush.msra.mxu0 %v447
        %589 = vmatpush.msra.mxu0 %v445
        %590 = vmatpush.msra.mxu0 %v443
        %591 = vmatmul.f32.gmra.mxu0 %v538
        %v592 = vpop.f32.mrf.mxu0
        %v593 = vadd.f32 %v527, %v592
        %594 = vmatmul.f32.gmra.mxu0 %v540
        %v595 = vpop.f32.mrf.mxu0
        %v596 = vadd.f32 %v530, %v595
        %597 = vmatmul.f32.gmra.mxu0 %v542
        %v598 = vpop.f32.mrf.mxu0
        %v599 = vadd.f32 %v533, %v598
        %600 = vmatmul.f32.gmra.mxu0 %v544
        %v601 = vpop.f32.mrf.mxu0
        %v602 = vadd.f32 %v536, %v601
        %603 = vdwg.mxu0
        %s604 = scalar_lea.vmem %s1, 128
        %v605 = vld [vmem:[%s604] sm:$0xff]
        %v606 = vld [vmem:[%s604 + $0x8] sm:$0xff]
        %v607 = vld [vmem:[%s604 + $0x10] sm:$0xff]
        %v608 = vld [vmem:[%s604 + $0x18] sm:$0xff]
        %v609 = vld [vmem:[%s604 + $0x20] sm:$0xff]
        %v610 = vld [vmem:[%s604 + $0x28] sm:$0xff]
        %v611 = vld [vmem:[%s604 + $0x30] sm:$0xff]
        %v612 = vld [vmem:[%s604 + $0x38] sm:$0xff]
        %vm613 = vcmask 1045504
        %v614 = vrot.slane %v438, 2
        %v615 = vrot.slane %v439, 2
        %v616 = vsel %vm613, %v614, %v615
        %v617 = vrot.slane %v440, 2
        %v618 = vsel %vm613, %v615, %v617
        %v619 = vrot.slane %v441, 2
        %v620 = vsel %vm613, %v617, %v619
        %v621 = vsel %vm471, %v616, 0
        %v623 = vsel %vm471, %v618, 0
        %v625 = vsel %vm471, %v620, 0
        %v627 = vsel %vm471, %v619, 0
        %629 = vmatpush.msra.mxu0 0.0
        %630 = vmatpush.msra.mxu0 0.0
        %631 = vmatpush.msra.mxu0 0.0
        %632 = vmatpush.msra.mxu0 0.0
        %633 = vmatpush.msra.mxu0 0.0
        %634 = vmatpush.msra.mxu0 0.0
        %635 = vmatpush.msra.mxu0 0.0
        %636 = vmatpush.msra.mxu0 0.0
        %637 = vmatpush.msra.mxu0 0.0
        %638 = vmatpush.msra.mxu0 0.0
        %639 = vmatpush.msra.mxu0 0.0
        %640 = vmatpush.msra.mxu0 0.0
        %641 = vmatpush.msra.mxu0 %v611
        %642 = vmatpush.msra.mxu0 %v609
        %643 = vmatpush.msra.mxu0 %v607
        %644 = vmatpush.msra.mxu0 %v605
        %645 = vmatmul.f32.gmra.mxu0 %v621
        %v646 = vpop.f32.mrf.mxu0
        %v647 = vadd.f32 0.0, %v646
        %648 = vmatmul.f32.gmra.mxu0 %v623
        %v649 = vpop.f32.mrf.mxu0
        %v650 = vadd.f32 0.0, %v649
        %651 = vmatmul.f32.gmra.mxu0 %v625
        %v652 = vpop.f32.mrf.mxu0
        %v653 = vadd.f32 0.0, %v652
        %654 = vmatmul.f32.gmra.mxu0 %v627
        %v655 = vpop.f32.mrf.mxu0
        %v656 = vadd.f32 0.0, %v655
        %657 = vdwg.mxu0
        %658 = vmatpush.msra.mxu0 0.0
        %659 = vmatpush.msra.mxu0 0.0
        %660 = vmatpush.msra.mxu0 0.0
        %661 = vmatpush.msra.mxu0 0.0
        %662 = vmatpush.msra.mxu0 0.0
        %663 = vmatpush.msra.mxu0 0.0
        %664 = vmatpush.msra.mxu0 0.0
        %665 = vmatpush.msra.mxu0 0.0
        %666 = vmatpush.msra.mxu0 0.0
        %667 = vmatpush.msra.mxu0 0.0
        %668 = vmatpush.msra.mxu0 0.0
        %669 = vmatpush.msra.mxu0 0.0
        %670 = vmatpush.msra.mxu0 %v612
        %671 = vmatpush.msra.mxu0 %v610
        %672 = vmatpush.msra.mxu0 %v608
        %673 = vmatpush.msra.mxu0 %v606
        %674 = vmatmul.f32.gmra.mxu0 %v621
        %v675 = vpop.f32.mrf.mxu0
        %v676 = vadd.f32 0.0, %v675
        %677 = vmatmul.f32.gmra.mxu0 %v623
        %v678 = vpop.f32.mrf.mxu0
        %v679 = vadd.f32 0.0, %v678
        %680 = vmatmul.f32.gmra.mxu0 %v625
        %v681 = vpop.f32.mrf.mxu0
        %v682 = vadd.f32 0.0, %v681
        %683 = vmatmul.f32.gmra.mxu0 %v627
        %v684 = vpop.f32.mrf.mxu0
        %v685 = vadd.f32 0.0, %v684
        %686 = vdwg.mxu0
        %v687 = vadd.f32 %v564, %v647
        %v688 = vadd.f32 %v593, %v676
        %v689 = vadd.f32 %v567, %v650
        %v690 = vadd.f32 %v596, %v679
        %v691 = vadd.f32 %v570, %v653
        %v692 = vadd.f32 %v599, %v682
        %v693 = vadd.f32 %v573, %v656
        %v694 = vadd.f32 %v602, %v685
        %s695 = scalar_lea.vmem %s1, 192
        %v696 = vld [vmem:[%s695] sm:$0xff]
        %v697 = vld [vmem:[%s695 + $0x8] sm:$0xff]
        %v698 = vld [vmem:[%s695 + $0x10] sm:$0xff]
        %v699 = vld [vmem:[%s695 + $0x18] sm:$0xff]
        %v700 = vld [vmem:[%s695 + $0x20] sm:$0xff]
        %v701 = vld [vmem:[%s695 + $0x28] sm:$0xff]
        %v702 = vld [vmem:[%s695 + $0x30] sm:$0xff]
        %v703 = vld [vmem:[%s695 + $0x38] sm:$0xff]
        %vm704 = vcmask 1044480
        %v705 = vrot.slane %v438, 3
        %v706 = vrot.slane %v439, 3
        %v707 = vsel %vm704, %v705, %v706
        %v708 = vrot.slane %v440, 3
        %v709 = vsel %vm704, %v706, %v708
        %v710 = vrot.slane %v441, 3
        %v711 = vsel %vm704, %v708, %v710
        %v712 = vsel %vm471, %v707, 0
        %v714 = vsel %vm471, %v709, 0
        %v716 = vsel %vm471, %v711, 0
        %v718 = vsel %vm471, %v710, 0
        %720 = vmatpush.msra.mxu0 0.0
        %721 = vmatpush.msra.mxu0 0.0
        %722 = vmatpush.msra.mxu0 0.0
        %723 = vmatpush.msra.mxu0 0.0
        %724 = vmatpush.msra.mxu0 0.0
        %725 = vmatpush.msra.mxu0 0.0
        %726 = vmatpush.msra.mxu0 0.0
        %727 = vmatpush.msra.mxu0 0.0
        %728 = vmatpush.msra.mxu0 0.0
        %729 = vmatpush.msra.mxu0 0.0
        %730 = vmatpush.msra.mxu0 0.0
        %731 = vmatpush.msra.mxu0 0.0
        %732 = vmatpush.msra.mxu0 %v702
        %733 = vmatpush.msra.mxu0 %v700
        %734 = vmatpush.msra.mxu0 %v698
        %735 = vmatpush.msra.mxu0 %v696
        %736 = vmatmul.f32.gmra.mxu0 %v712
        %v737 = vpop.f32.mrf.mxu0
        %v738 = vadd.f32 0.0, %v737
        %739 = vmatmul.f32.gmra.mxu0 %v714
        %v740 = vpop.f32.mrf.mxu0
        %v741 = vadd.f32 0.0, %v740
        %742 = vmatmul.f32.gmra.mxu0 %v716
        %v743 = vpop.f32.mrf.mxu0
        %v744 = vadd.f32 0.0, %v743
        %745 = vmatmul.f32.gmra.mxu0 %v718
        %v746 = vpop.f32.mrf.mxu0
        %v747 = vadd.f32 0.0, %v746
        %748 = vdwg.mxu0
        %749 = vmatpush.msra.mxu0 0.0
        %750 = vmatpush.msra.mxu0 0.0
        %751 = vmatpush.msra.mxu0 0.0
        %752 = vmatpush.msra.mxu0 0.0
        %753 = vmatpush.msra.mxu0 0.0
        %754 = vmatpush.msra.mxu0 0.0
        %755 = vmatpush.msra.mxu0 0.0
        %756 = vmatpush.msra.mxu0 0.0
        %757 = vmatpush.msra.mxu0 0.0
        %758 = vmatpush.msra.mxu0 0.0
        %759 = vmatpush.msra.mxu0 0.0
        %760 = vmatpush.msra.mxu0 0.0
        %761 = vmatpush.msra.mxu0 %v703
        %762 = vmatpush.msra.mxu0 %v701
        %763 = vmatpush.msra.mxu0 %v699
        %764 = vmatpush.msra.mxu0 %v697
        %765 = vmatmul.f32.gmra.mxu0 %v712
        %v766 = vpop.f32.mrf.mxu0
        %v767 = vadd.f32 0.0, %v766
        %768 = vmatmul.f32.gmra.mxu0 %v714
        %v769 = vpop.f32.mrf.mxu0
        %v770 = vadd.f32 0.0, %v769
        %771 = vmatmul.f32.gmra.mxu0 %v716
        %v772 = vpop.f32.mrf.mxu0
        %v773 = vadd.f32 0.0, %v772
        %774 = vmatmul.f32.gmra.mxu0 %v718
        %v775 = vpop.f32.mrf.mxu0
        %v776 = vadd.f32 0.0, %v775
        %777 = vdwg.mxu0
        %v778 = vadd.f32 %v687, %v738
        %v779 = vadd.f32 %v688, %v767
        %v780 = vadd.f32 %v689, %v741
        %v781 = vadd.f32 %v690, %v770
        %v782 = vadd.f32 %v691, %v744
        %v783 = vadd.f32 %v692, %v773
        %v784 = vadd.f32 %v693, %v747
        %v785 = vadd.f32 %v694, %v776
        %s786 = scalar_lea.vmem %s1, 256
        %v787 = vld [vmem:[%s786] sm:$0xff]
        %v788 = vld [vmem:[%s786 + $0x8] sm:$0xff]
        %v789 = vld [vmem:[%s786 + $0x10] sm:$0xff]
        %v790 = vld [vmem:[%s786 + $0x18] sm:$0xff]
        %v791 = vld [vmem:[%s786 + $0x20] sm:$0xff]
        %v792 = vld [vmem:[%s786 + $0x28] sm:$0xff]
        %v793 = vld [vmem:[%s786 + $0x30] sm:$0xff]
        %v794 = vld [vmem:[%s786 + $0x38] sm:$0xff]
        %vm795 = vcmask 1043456
        %v796 = vrot.slane %v438, 4
        %v797 = vrot.slane %v439, 4
        %v798 = vsel %vm795, %v796, %v797
        %v799 = vrot.slane %v440, 4
        %v800 = vsel %vm795, %v797, %v799
        %v801 = vrot.slane %v441, 4
        %v802 = vsel %vm795, %v799, %v801
        %v803 = vsel %vm471, %v798, 0
        %v805 = vsel %vm471, %v800, 0
        %v807 = vsel %vm471, %v802, 0
        %v809 = vsel %vm471, %v801, 0
        %811 = vmatpush.msra.mxu0 0.0
        %812 = vmatpush.msra.mxu0 0.0
        %813 = vmatpush.msra.mxu0 0.0
        %814 = vmatpush.msra.mxu0 0.0
        %815 = vmatpush.msra.mxu0 0.0
        %816 = vmatpush.msra.mxu0 0.0
        %817 = vmatpush.msra.mxu0 0.0
        %818 = vmatpush.msra.mxu0 0.0
        %819 = vmatpush.msra.mxu0 0.0
        %820 = vmatpush.msra.mxu0 0.0
        %821 = vmatpush.msra.mxu0 0.0
        %822 = vmatpush.msra.mxu0 0.0
        %823 = vmatpush.msra.mxu0 %v793
        %824 = vmatpush.msra.mxu0 %v791
        %825 = vmatpush.msra.mxu0 %v789
        %826 = vmatpush.msra.mxu0 %v787
        %827 = vmatmul.f32.gmra.mxu0 %v803
        %v828 = vpop.f32.mrf.mxu0
        %v829 = vadd.f32 0.0, %v828
        %830 = vmatmul.f32.gmra.mxu0 %v805
        %v831 = vpop.f32.mrf.mxu0
        %v832 = vadd.f32 0.0, %v831
        %833 = vmatmul.f32.gmra.mxu0 %v807
        %v834 = vpop.f32.mrf.mxu0
        %v835 = vadd.f32 0.0, %v834
        %836 = vmatmul.f32.gmra.mxu0 %v809
        %v837 = vpop.f32.mrf.mxu0
        %v838 = vadd.f32 0.0, %v837
        %839 = vdwg.mxu0
        %840 = vmatpush.msra.mxu0 0.0
        %841 = vmatpush.msra.mxu0 0.0
        %842 = vmatpush.msra.mxu0 0.0
        %843 = vmatpush.msra.mxu0 0.0
        %844 = vmatpush.msra.mxu0 0.0
        %845 = vmatpush.msra.mxu0 0.0
        %846 = vmatpush.msra.mxu0 0.0
        %847 = vmatpush.msra.mxu0 0.0
        %848 = vmatpush.msra.mxu0 0.0
        %849 = vmatpush.msra.mxu0 0.0
        %850 = vmatpush.msra.mxu0 0.0
        %851 = vmatpush.msra.mxu0 0.0
        %852 = vmatpush.msra.mxu0 %v794
        %853 = vmatpush.msra.mxu0 %v792
        %854 = vmatpush.msra.mxu0 %v790
        %855 = vmatpush.msra.mxu0 %v788
        %856 = vmatmul.f32.gmra.mxu0 %v803
        %v857 = vpop.f32.mrf.mxu0
        %v858 = vadd.f32 0.0, %v857
        %859 = vmatmul.f32.gmra.mxu0 %v805
        %v860 = vpop.f32.mrf.mxu0
        %v861 = vadd.f32 0.0, %v860
        %862 = vmatmul.f32.gmra.mxu0 %v807
        %v863 = vpop.f32.mrf.mxu0
        %v864 = vadd.f32 0.0, %v863
        %865 = vmatmul.f32.gmra.mxu0 %v809
        %v866 = vpop.f32.mrf.mxu0
        %v867 = vadd.f32 0.0, %v866
        %868 = vdwg.mxu0
        %v869 = vadd.f32 %v778, %v829
        %v870 = vadd.f32 %v779, %v858
        %v871 = vadd.f32 %v780, %v832
        %v872 = vadd.f32 %v781, %v861
        %v873 = vadd.f32 %v782, %v835
        %v874 = vadd.f32 %v783, %v864
        %v875 = vadd.f32 %v784, %v838
        %v876 = vadd.f32 %v785, %v867
        %v877 = vld [vmem:[%s2] sm:$0x3]
        %v879 = vperm.slane %v877, 0
        %v880 = vperm.slane %v877, 1
        %v883 = vadd.f32 %v869, %v879
        %v884 = vadd.f32 %v870, %v880
        %v885 = vadd.f32 %v871, %v879
        %v886 = vadd.f32 %v872, %v880
        %v887 = vadd.f32 %v873, %v879
        %v888 = vadd.f32 %v874, %v880
        %v889 = vadd.f32 %v875, %v879
        %v890 = vadd.f32 %v876, %v880
        %v891 = vmax.f32 %v883, 0.0
        %v892 = vmax.f32 %v884, 0.0
        %v893 = vmax.f32 %v885, 0.0
        %v894 = vmax.f32 %v886, 0.0
        %v895 = vmax.f32 %v887, 0.0
        %v896 = vmax.f32 %v888, 0.0
        %v897 = vmax.f32 %v889, 0.0
        %v898 = vmax.f32 %v890, 0.0
        %v907 = vrot.slane %v891, 1
        %v908 = vrot.slane %v893, 1
        %v909 = vsel %vm463, %v907, %v908
        %v910 = vrot.slane %v892, 1
        %v911 = vrot.slane %v894, 1
        %v912 = vsel %vm463, %v910, %v911
        %v913 = vrot.slane %v895, 1
        %v914 = vsel %vm463, %v908, %v913
        %v915 = vrot.slane %v896, 1
        %v916 = vsel %vm463, %v911, %v915
        %v917 = vrot.slane %v897, 1
        %v918 = vsel %vm463, %v913, %v917
        %v919 = vrot.slane %v898, 1
        %v920 = vsel %vm463, %v915, %v919
        %v929 = vmax.f32 %v891, %v909
        %v930 = vmax.f32 %v892, %v912
        %v931 = vmax.f32 %v893, %v914
        %v932 = vmax.f32 %v894, %v916
        %v933 = vmax.f32 %v895, %v918
        %v934 = vmax.f32 %v896, %v920
        %v935 = vmax.f32 %v897, %v917
        %v936 = vmax.f32 %v898, %v919
        %945 = vrot.lane.b32.xlu0 %v929, 127
        %v946 = vpop.permute.xlu0 %945
        %947 = vrot.lane.b32.xlu0 %v930, 127
        %v948 = vpop.permute.xlu0 %947
        %949 = vrot.lane.b32.xlu0 %v931, 127
        %v950 = vpop.permute.xlu0 %949
        %951 = vrot.lane.b32.xlu0 %v932, 127
        %v952 = vpop.permute.xlu0 %951
        %953 = vrot.lane.b32.xlu0 %v933, 127
        %v954 = vpop.permute.xlu0 %953
        %955 = vrot.lane.b32.xlu0 %v934, 127
        %v956 = vpop.permute.xlu0 %955
        %957 = vrot.lane.b32.xlu0 %v935, 127
        %v958 = vpop.permute.xlu0 %957
        %959 = vrot.lane.b32.xlu0 %v936, 127
        %v960 = vpop.permute.xlu0 %959
        %vm961 = vcmask 1039360
        %v962 = vsel %vm961, %v946, %v948
        %v963 = vsel %vm961, %v950, %v952
        %v964 = vsel %vm961, %v954, %v956
        %v965 = vsel %vm961, %v958, %v960
        %v974 = vmax.f32 %v929, %v962
        %v975 = vmax.f32 %v930, %v948
        %v976 = vmax.f32 %v931, %v963
        %v977 = vmax.f32 %v932, %v952
        %v978 = vmax.f32 %v933, %v964
        %v979 = vmax.f32 %v934, %v956
        %v980 = vmax.f32 %v935, %v965
        %v981 = vmax.f32 %v936, %v960
        %v982 = vld [vmem:[%s3] sm:$0xff]
        %v983 = vld [vmem:[%s3 + $0x8] sm:$0x3f]
        %vm984 = vcmask 220160
        %v986 = vsel %vm984, %v982, 0
        %v989 = vsel %vm984, %v983, 0
        %vm991 = vcmask 1042432
        %v993 = vsel %vm991, %v980, 0
        %v996 = vsel %vm991, %v981, 0
        %998 = vmatpush.msra.mxu0 0.0
        %999 = vmatpush.msra.mxu0 0.0
        %1000 = vmatpush.msra.mxu0 0.0
        %1001 = vmatpush.msra.mxu0 0.0
        %1002 = vmatpush.msra.mxu0 0.0
        %1003 = vmatpush.msra.mxu0 0.0
        %1004 = vmatpush.msra.mxu0 0.0
        %1005 = vmatpush.msra.mxu0 0.0
        %1006 = vmatpush.msra.mxu0 0.0
        %1007 = vmatpush.msra.mxu0 0.0
        %1008 = vmatpush.msra.mxu0 0.0
        %1009 = vmatpush.msra.mxu0 0.0
        %1010 = vmatpush.msra.mxu0 %v993
        %1011 = vmatpush.msra.mxu0 %v978
        %1012 = vmatpush.msra.mxu0 %v976
        %1013 = vmatpush.msra.mxu0 %v974
        %1014 = vmatmul.f32.gmra.mxu0 %v986
        %v1015 = vpop.f32.mrf.mxu0
        %v1016 = vadd.f32 0.0, %v1015
        %1017 = vmatmul.f32.gmra.mxu0 %v989
        %v1018 = vpop.f32.mrf.mxu0
        %v1019 = vadd.f32 0.0, %v1018
        %1020 = vdwg.mxu0
        %1021 = vmatpush.msra.mxu0 0.0
        %1022 = vmatpush.msra.mxu0 0.0
        %1023 = vmatpush.msra.mxu0 0.0
        %1024 = vmatpush.msra.mxu0 0.0
        %1025 = vmatpush.msra.mxu0 0.0
        %1026 = vmatpush.msra.mxu0 0.0
        %1027 = vmatpush.msra.mxu0 0.0
        %1028 = vmatpush.msra.mxu0 0.0
        %1029 = vmatpush.msra.mxu0 0.0
        %1030 = vmatpush.msra.mxu0 0.0
        %1031 = vmatpush.msra.mxu0 0.0
        %1032 = vmatpush.msra.mxu0 0.0
        %1033 = vmatpush.msra.mxu0 %v996
        %1034 = vmatpush.msra.mxu0 %v979
        %1035 = vmatpush.msra.mxu0 %v977
        %1036 = vmatpush.msra.mxu0 %v975
        %1037 = vmatmul.f32.gmra.mxu0 %v986
        %v1038 = vpop.f32.mrf.mxu0
        %v1039 = vadd.f32 0.0, %v1038
        %1040 = vmatmul.f32.gmra.mxu0 %v989
        %v1041 = vpop.f32.mrf.mxu0
        %v1042 = vadd.f32 0.0, %v1041
        %1043 = vdwg.mxu0
        %v1044 = vld [vmem:[%s4] sm:$0xff]
        %v1045 = vld [vmem:[%s4 + $0x8] sm:$0xff]
        %v1046 = vld [vmem:[%s4 + $0x10] sm:$0xff]
        %v1047 = vld [vmem:[%s4 + $0x18] sm:$0xff]
        %v1048 = vld [vmem:[%s4 + $0x20] sm:$0xff]
        %v1049 = vld [vmem:[%s4 + $0x28] sm:$0xff]
        %v1050 = vld [vmem:[%s4 + $0x30] sm:$0xff]
        %v1051 = vld [vmem:[%s4 + $0x38] sm:$0xff]
        %v1052 = vld [vmem:[%s4 + $0x40] sm:$0xff]
        %v1053 = vld [vmem:[%s4 + $0x48] sm:$0xff]
        %v1054 = vld [vmem:[%s4 + $0x50] sm:$0xff]
        %v1055 = vld [vmem:[%s4 + $0x58] sm:$0xff]
        %v1056 = vld [vmem:[%s4 + $0x60] sm:$0xff]
        %v1057 = vld [vmem:[%s4 + $0x68] sm:$0xff]
        %v1058 = vld [vmem:[%s4 + $0x70] sm:$0xff]
        %v1059 = vld [vmem:[%s4 + $0x78] sm:$0xff]
        %v1060 = vld [vmem:[%s4 + $0x80] sm:$0xff]
        %v1061 = vld [vmem:[%s4 + $0x88] sm:$0xff]
        %v1062 = vld [vmem:[%s4 + $0x90] sm:$0xff]
        %v1063 = vld [vmem:[%s4 + $0x98] sm:$0xff]
        %v1064 = vld [vmem:[%s4 + $0xa0] sm:$0xff]
        %v1065 = vld [vmem:[%s4 + $0xa8] sm:$0xff]
        %v1066 = vld [vmem:[%s4 + $0xb0] sm:$0xff]
        %v1067 = vld [vmem:[%s4 + $0xb8] sm:$0xff]
        %v1068 = vld [vmem:[%s4 + $0xc0] sm:$0xff]
        %v1069 = vld [vmem:[%s4 + $0xc8] sm:$0xff]
        %v1070 = vld [vmem:[%s4 + $0xd0] sm:$0xff]
        %v1071 = vld [vmem:[%s4 + $0xd8] sm:$0xff]
        %v1072 = vld [vmem:[%s4 + $0xe0] sm:$0xff]
        %v1073 = vld [vmem:[%s4 + $0xe8] sm:$0xff]
        %v1074 = vld [vmem:[%s4 + $0xf0] sm:$0xff]
        %v1075 = vld [vmem:[%s4 + $0xf8] sm:$0xff]
        %v1076 = vld [vmem:[%s4 + $0x100] sm:$0xff]
        %v1077 = vld [vmem:[%s4 + $0x108] sm:$0xff]
        %v1078 = vld [vmem:[%s4 + $0x110] sm:$0xff]
        %v1079 = vld [vmem:[%s4 + $0x118] sm:$0xff]
        %v1080 = vld [vmem:[%s4 + $0x120] sm:$0xff]
        %v1081 = vld [vmem:[%s4 + $0x128] sm:$0xff]
        %v1082 = vld [vmem:[%s4 + $0x130] sm:$0xff]
        %v1083 = vld [vmem:[%s4 + $0x138] sm:$0xff]
        %v1084 = vld [vmem:[%s4 + $0x140] sm:$0x7f]
        %v1085 = vld [vmem:[%s4 + $0x148] sm:$0x7f]
        %s1086 = scalar_lea.vmem %s4, 336
        %v1087 = vld [vmem:[%s1086] sm:$0xff]
        %v1088 = vld [vmem:[%s1086 + $0x8] sm:$0xff]
        %v1089 = vld [vmem:[%s1086 + $0x10] sm:$0xff]
        %v1090 = vld [vmem:[%s1086 + $0x18] sm:$0xff]
        %v1091 = vld [vmem:[%s1086 + $0x20] sm:$0xff]
        %v1092 = vld [vmem:[%s1086 + $0x28] sm:$0xff]
        %v1093 = vld [vmem:[%s1086 + $0x30] sm:$0xff]
        %v1094 = vld [vmem:[%s1086 + $0x38] sm:$0xff]
        %v1095 = vld [vmem:[%s1086 + $0x40] sm:$0xff]
        %v1096 = vld [vmem:[%s1086 + $0x48] sm:$0xff]
        %v1097 = vld [vmem:[%s1086 + $0x50] sm:$0xff]
        %v1098 = vld [vmem:[%s1086 + $0x58] sm:$0xff]
        %v1099 = vld [vmem:[%s1086 + $0x60] sm:$0xff]
        %v1100 = vld [vmem:[%s1086 + $0x68] sm:$0xff]
        %v1101 = vld [vmem:[%s1086 + $0x70] sm:$0xff]
        %v1102 = vld [vmem:[%s1086 + $0x78] sm:$0xff]
        %v1103 = vld [vmem:[%s1086 + $0x80] sm:$0xff]
        %v1104 = vld [vmem:[%s1086 + $0x88] sm:$0xff]
        %v1105 = vld [vmem:[%s1086 + $0x90] sm:$0xff]
        %v1106 = vld [vmem:[%s1086 + $0x98] sm:$0xff]
        %v1107 = vld [vmem:[%s1086 + $0xa0] sm:$0xff]
        %v1108 = vld [vmem:[%s1086 + $0xa8] sm:$0xff]
        %v1109 = vld [vmem:[%s1086 + $0xb0] sm:$0xff]
        %v1110 = vld [vmem:[%s1086 + $0xb8] sm:$0xff]
        %v1111 = vld [vmem:[%s1086 + $0xc0] sm:$0xff]
        %v1112 = vld [vmem:[%s1086 + $0xc8] sm:$0xff]
        %v1113 = vld [vmem:[%s1086 + $0xd0] sm:$0xff]
        %v1114 = vld [vmem:[%s1086 + $0xd8] sm:$0xff]
        %v1115 = vld [vmem:[%s1086 + $0xe0] sm:$0xff]
        %v1116 = vld [vmem:[%s1086 + $0xe8] sm:$0xff]
        %v1117 = vld [vmem:[%s1086 + $0xf0] sm:$0xff]
        %v1118 = vld [vmem:[%s1086 + $0xf8] sm:$0xff]
        %v1119 = vld [vmem:[%s1086 + $0x100] sm:$0xff]
        %v1120 = vld [vmem:[%s1086 + $0x108] sm:$0xff]
        %v1121 = vld [vmem:[%s1086 + $0x110] sm:$0xff]
        %v1122 = vld [vmem:[%s1086 + $0x118] sm:$0xff]
        %v1123 = vld [vmem:[%s1086 + $0x120] sm:$0xff]
        %v1124 = vld [vmem:[%s1086 + $0x128] sm:$0xff]
        %v1125 = vld [vmem:[%s1086 + $0x130] sm:$0xff]
        %v1126 = vld [vmem:[%s1086 + $0x138] sm:$0xff]
        %v1127 = vld [vmem:[%s1086 + $0x140] sm:$0x7f]
        %v1128 = vld [vmem:[%s1086 + $0x148] sm:$0x7f]
        %v1133 = vrot.slane %v1016, 1
        %v1134 = vrot.slane %v1019, 1
        %v1135 = vsel %vm463, %v1133, %v1134
        %v1136 = vrot.slane %v1039, 1
        %v1137 = vrot.slane %v1042, 1
        %v1138 = vsel %vm463, %v1136, %v1137
        %vm1141 = vcmask 318464
        %v1142 = vsel %vm1141, %v1138, 0
        %v1144 = vsel %vm1141, %v1137, 0
        %v1147 = vsel %vm463, %v1127, 0
        %v1150 = vsel %vm463, %v1128, 0
        %1152 = vmatpush.msra.mxu0 %v1117
        %1153 = vmatpush.msra.mxu0 %v1115
        %1154 = vmatpush.msra.mxu0 %v1113
        %1155 = vmatpush.msra.mxu0 %v1111
        %1156 = vmatpush.msra.mxu0 %v1109
        %1157 = vmatpush.msra.mxu0 %v1107
        %1158 = vmatpush.msra.mxu0 %v1105
        %1159 = vmatpush.msra.mxu0 %v1103
        %1160 = vmatpush.msra.mxu0 %v1101
        %1161 = vmatpush.msra.mxu0 %v1099
        %1162 = vmatpush.msra.mxu0 %v1097
        %1163 = vmatpush.msra.mxu0 %v1095
        %1164 = vmatpush.msra.mxu0 %v1093
        %1165 = vmatpush.msra.mxu0 %v1091
        %1166 = vmatpush.msra.mxu0 %v1089
        %1167 = vmatpush.msra.mxu0 %v1087
        %1168 = vmatmul.f32.gmra.mxu0 %v1135
        %v1169 = vpop.f32.mrf.mxu0
        %v1170 = vadd.f32 0.0, %v1169
        %1171 = vmatmul.f32.gmra.mxu0 %v1134
        %v1172 = vpop.f32.mrf.mxu0
        %v1173 = vadd.f32 0.0, %v1172
        %1174 = vdwg.mxu0
        %1175 = vmatpush.msra.mxu0 0.0
        %1176 = vmatpush.msra.mxu0 0.0
        %1177 = vmatpush.msra.mxu0 0.0
        %1178 = vmatpush.msra.mxu0 0.0
        %1179 = vmatpush.msra.mxu0 0.0
        %1180 = vmatpush.msra.mxu0 0.0
        %1181 = vmatpush.msra.mxu0 0.0
        %1182 = vmatpush.msra.mxu0 0.0
        %1183 = vmatpush.msra.mxu0 0.0
        %1184 = vmatpush.msra.mxu0 0.0
        %1185 = vmatpush.msra.mxu0 0.0
        %1186 = vmatpush.msra.mxu0 %v1147
        %1187 = vmatpush.msra.mxu0 %v1125
        %1188 = vmatpush.msra.mxu0 %v1123
        %1189 = vmatpush.msra.mxu0 %v1121
        %1190 = vmatpush.msra.mxu0 %v1119
        %1191 = vmatmul.f32.gmra.mxu0 %v1142
        %v1192 = vpop.f32.mrf.mxu0
        %v1193 = vadd.f32 %v1170, %v1192
        %1194 = vmatmul.f32.gmra.mxu0 %v1144
        %v1195 = vpop.f32.mrf.mxu0
        %v1196 = vadd.f32 %v1173, %v1195
        %1197 = vdwg.mxu0
        %1198 = vmatpush.msra.mxu0 %v1118
        %1199 = vmatpush.msra.mxu0 %v1116
        %1200 = vmatpush.msra.mxu0 %v1114
        %1201 = vmatpush.msra.mxu0 %v1112
        %1202 = vmatpush.msra.mxu0 %v1110
        %1203 = vmatpush.msra.mxu0 %v1108
        %1204 = vmatpush.msra.mxu0 %v1106
        %1205 = vmatpush.msra.mxu0 %v1104
        %1206 = vmatpush.msra.mxu0 %v1102
        %1207 = vmatpush.msra.mxu0 %v1100
        %1208 = vmatpush.msra.mxu0 %v1098
        %1209 = vmatpush.msra.mxu0 %v1096
        %1210 = vmatpush.msra.mxu0 %v1094
        %1211 = vmatpush.msra.mxu0 %v1092
        %1212 = vmatpush.msra.mxu0 %v1090
        %1213 = vmatpush.msra.mxu0 %v1088
        %1214 = vmatmul.f32.gmra.mxu0 %v1135
        %v1215 = vpop.f32.mrf.mxu0
        %v1216 = vadd.f32 0.0, %v1215
        %1217 = vmatmul.f32.gmra.mxu0 %v1134
        %v1218 = vpop.f32.mrf.mxu0
        %v1219 = vadd.f32 0.0, %v1218
        %1220 = vdwg.mxu0
        %1221 = vmatpush.msra.mxu0 0.0
        %1222 = vmatpush.msra.mxu0 0.0
        %1223 = vmatpush.msra.mxu0 0.0
        %1224 = vmatpush.msra.mxu0 0.0
        %1225 = vmatpush.msra.mxu0 0.0
        %1226 = vmatpush.msra.mxu0 0.0
        %1227 = vmatpush.msra.mxu0 0.0
        %1228 = vmatpush.msra.mxu0 0.0
        %1229 = vmatpush.msra.mxu0 0.0
        %1230 = vmatpush.msra.mxu0 0.0
        %1231 = vmatpush.msra.mxu0 0.0
        %1232 = vmatpush.msra.mxu0 %v1150
        %1233 = vmatpush.msra.mxu0 %v1126
        %1234 = vmatpush.msra.mxu0 %v1124
        %1235 = vmatpush.msra.mxu0 %v1122
        %1236 = vmatpush.msra.mxu0 %v1120
        %1237 = vmatmul.f32.gmra.mxu0 %v1142
        %v1238 = vpop.f32.mrf.mxu0
        %v1239 = vadd.f32 %v1216, %v1238
        %1240 = vmatmul.f32.gmra.mxu0 %v1144
        %v1241 = vpop.f32.mrf.mxu0
        %v1242 = vadd.f32 %v1219, %v1241
        %1243 = vdwg.mxu0
        %v1244 = vsel %vm1141, %v1039, 0
        %v1246 = vsel %vm1141, %v1042, 0
        %v1249 = vsel %vm463, %v1084, 0
        %v1252 = vsel %vm463, %v1085, 0
        %1254 = vmatpush.msra.mxu0 %v1074
        %1255 = vmatpush.msra.mxu0 %v1072
        %1256 = vmatpush.msra.mxu0 %v1070
        %1257 = vmatpush.msra.mxu0 %v1068
        %1258 = vmatpush.msra.mxu0 %v1066
        %1259 = vmatpush.msra.mxu0 %v1064
        %1260 = vmatpush.msra.mxu0 %v1062
        %1261 = vmatpush.msra.mxu0 %v1060
        %1262 = vmatpush.msra.mxu0 %v1058
        %1263 = vmatpush.msra.mxu0 %v1056
        %1264 = vmatpush.msra.mxu0 %v1054
        %1265 = vmatpush.msra.mxu0 %v1052
        %1266 = vmatpush.msra.mxu0 %v1050
        %1267 = vmatpush.msra.mxu0 %v1048
        %1268 = vmatpush.msra.mxu0 %v1046
        %1269 = vmatpush.msra.mxu0 %v1044
        %1270 = vmatmul.f32.gmra.mxu0 %v1016
        %v1271 = vpop.f32.mrf.mxu0
        %v1272 = vadd.f32 %v1193, %v1271
        %1273 = vmatmul.f32.gmra.mxu0 %v1019
        %v1274 = vpop.f32.mrf.mxu0
        %v1275 = vadd.f32 %v1196, %v1274
        %1276 = vdwg.mxu0
        %1277 = vmatpush.msra.mxu0 0.0
        %1278 = vmatpush.msra.mxu0 0.0
        %1279 = vmatpush.msra.mxu0 0.0
        %1280 = vmatpush.msra.mxu0 0.0
        %1281 = vmatpush.msra.mxu0 0.0
        %1282 = vmatpush.msra.mxu0 0.0
        %1283 = vmatpush.msra.mxu0 0.0
        %1284 = vmatpush.msra.mxu0 0.0
        %1285 = vmatpush.msra.mxu0 0.0
        %1286 = vmatpush.msra.mxu0 0.0
        %1287 = vmatpush.msra.mxu0 0.0
        %1288 = vmatpush.msra.mxu0 %v1249
        %1289 = vmatpush.msra.mxu0 %v1082
        %1290 = vmatpush.msra.mxu0 %v1080
        %1291 = vmatpush.msra.mxu0 %v1078
        %1292 = vmatpush.msra.mxu0 %v1076
        %1293 = vmatmul.f32.gmra.mxu0 %v1244
        %v1294 = vpop.f32.mrf.mxu0
        %v1295 = vadd.f32 %v1272, %v1294
        %1296 = vmatmul.f32.gmra.mxu0 %v1246
        %v1297 = vpop.f32.mrf.mxu0
        %v1298 = vadd.f32 %v1275, %v1297
        %1299 = vdwg.mxu0
        %1300 = vmatpush.msra.mxu0 %v1075
        %1301 = vmatpush.msra.mxu0 %v1073
        %1302 = vmatpush.msra.mxu0 %v1071
        %1303 = vmatpush.msra.mxu0 %v1069
        %1304 = vmatpush.msra.mxu0 %v1067
        %1305 = vmatpush.msra.mxu0 %v1065
        %1306 = vmatpush.msra.mxu0 %v1063
        %1307 = vmatpush.msra.mxu0 %v1061
        %1308 = vmatpush.msra.mxu0 %v1059
        %1309 = vmatpush.msra.mxu0 %v1057
        %1310 = vmatpush.msra.mxu0 %v1055
        %1311 = vmatpush.msra.mxu0 %v1053
        %1312 = vmatpush.msra.mxu0 %v1051
        %1313 = vmatpush.msra.mxu0 %v1049
        %1314 = vmatpush.msra.mxu0 %v1047
        %1315 = vmatpush.msra.mxu0 %v1045
        %1316 = vmatmul.f32.gmra.mxu0 %v1016
        %v1317 = vpop.f32.mrf.mxu0
        %v1318 = vadd.f32 %v1239, %v1317
        %1319 = vmatmul.f32.gmra.mxu0 %v1019
        %v1320 = vpop.f32.mrf.mxu0
        %v1321 = vadd.f32 %v1242, %v1320
        %1322 = vdwg.mxu0
        %1323 = vmatpush.msra.mxu0 0.0
        %1324 = vmatpush.msra.mxu0 0.0
        %1325 = vmatpush.msra.mxu0 0.0
        %1326 = vmatpush.msra.mxu0 0.0
        %1327 = vmatpush.msra.mxu0 0.0
        %1328 = vmatpush.msra.mxu0 0.0
        %1329 = vmatpush.msra.mxu0 0.0
        %1330 = vmatpush.msra.mxu0 0.0
        %1331 = vmatpush.msra.mxu0 0.0
        %1332 = vmatpush.msra.mxu0 0.0
        %1333 = vmatpush.msra.mxu0 0.0
        %1334 = vmatpush.msra.mxu0 %v1252
        %1335 = vmatpush.msra.mxu0 %v1083
        %1336 = vmatpush.msra.mxu0 %v1081
        %1337 = vmatpush.msra.mxu0 %v1079
        %1338 = vmatpush.msra.mxu0 %v1077
        %1339 = vmatmul.f32.gmra.mxu0 %v1244
        %v1340 = vpop.f32.mrf.mxu0
        %v1341 = vadd.f32 %v1318, %v1340
        %1342 = vmatmul.f32.gmra.mxu0 %v1246
        %v1343 = vpop.f32.mrf.mxu0
        %v1344 = vadd.f32 %v1321, %v1343
        %1345 = vdwg.mxu0
        %s1346 = scalar_lea.vmem %s4, 672
        %v1347 = vld [vmem:[%s1346] sm:$0xff]
        %v1348 = vld [vmem:[%s1346 + $0x8] sm:$0xff]
        %v1349 = vld [vmem:[%s1346 + $0x10] sm:$0xff]
        %v1350 = vld [vmem:[%s1346 + $0x18] sm:$0xff]
        %v1351 = vld [vmem:[%s1346 + $0x20] sm:$0xff]
        %v1352 = vld [vmem:[%s1346 + $0x28] sm:$0xff]
        %v1353 = vld [vmem:[%s1346 + $0x30] sm:$0xff]
        %v1354 = vld [vmem:[%s1346 + $0x38] sm:$0xff]
        %v1355 = vld [vmem:[%s1346 + $0x40] sm:$0xff]
        %v1356 = vld [vmem:[%s1346 + $0x48] sm:$0xff]
        %v1357 = vld [vmem:[%s1346 + $0x50] sm:$0xff]
        %v1358 = vld [vmem:[%s1346 + $0x58] sm:$0xff]
        %v1359 = vld [vmem:[%s1346 + $0x60] sm:$0xff]
        %v1360 = vld [vmem:[%s1346 + $0x68] sm:$0xff]
        %v1361 = vld [vmem:[%s1346 + $0x70] sm:$0xff]
        %v1362 = vld [vmem:[%s1346 + $0x78] sm:$0xff]
        %v1363 = vld [vmem:[%s1346 + $0x80] sm:$0xff]
        %v1364 = vld [vmem:[%s1346 + $0x88] sm:$0xff]
        %v1365 = vld [vmem:[%s1346 + $0x90] sm:$0xff]
        %v1366 = vld [vmem:[%s1346 + $0x98] sm:$0xff]
        %v1367 = vld [vmem:[%s1346 + $0xa0] sm:$0xff]
        %v1368 = vld [vmem:[%s1346 + $0xa8] sm:$0xff]
        %v1369 = vld [vmem:[%s1346 + $0xb0] sm:$0xff]
        %v1370 = vld [vmem:[%s1346 + $0xb8] sm:$0xff]
        %v1371 = vld [vmem:[%s1346 + $0xc0] sm:$0xff]
        %v1372 = vld [vmem:[%s1346 + $0xc8] sm:$0xff]
        %v1373 = vld [vmem:[%s1346 + $0xd0] sm:$0xff]
        %v1374 = vld [vmem:[%s1346 + $0xd8] sm:$0xff]
        %v1375 = vld [vmem:[%s1346 + $0xe0] sm:$0xff]
        %v1376 = vld [vmem:[%s1346 + $0xe8] sm:$0xff]
        %v1377 = vld [vmem:[%s1346 + $0xf0] sm:$0xff]
        %v1378 = vld [vmem:[%s1346 + $0xf8] sm:$0xff]
        %v1379 = vld [vmem:[%s1346 + $0x100] sm:$0xff]
        %v1380 = vld [vmem:[%s1346 + $0x108] sm:$0xff]
        %v1381 = vld [vmem:[%s1346 + $0x110] sm:$0xff]
        %v1382 = vld [vmem:[%s1346 + $0x118] sm:$0xff]
        %v1383 = vld [vmem:[%s1346 + $0x120] sm:$0xff]
        %v1384 = vld [vmem:[%s1346 + $0x128] sm:$0xff]
        %v1385 = vld [vmem:[%s1346 + $0x130] sm:$0xff]
        %v1386 = vld [vmem:[%s1346 + $0x138] sm:$0xff]
        %v1387 = vld [vmem:[%s1346 + $0x140] sm:$0x7f]
        %v1388 = vld [vmem:[%s1346 + $0x148] sm:$0x7f]
        %v1389 = vrot.slane %v1016, 2
        %v1390 = vrot.slane %v1019, 2
        %v1391 = vsel %vm613, %v1389, %v1390
        %v1392 = vrot.slane %v1039, 2
        %v1393 = vrot.slane %v1042, 2
        %v1394 = vsel %vm613, %v1392, %v1393
        %v1397 = vsel %vm1141, %v1394, 0
        %v1399 = vsel %vm1141, %v1393, 0
        %v1402 = vsel %vm463, %v1387, 0
        %v1405 = vsel %vm463, %v1388, 0
        %1407 = vmatpush.msra.mxu0 %v1377
        %1408 = vmatpush.msra.mxu0 %v1375
        %1409 = vmatpush.msra.mxu0 %v1373
        %1410 = vmatpush.msra.mxu0 %v1371
        %1411 = vmatpush.msra.mxu0 %v1369
        %1412 = vmatpush.msra.mxu0 %v1367
        %1413 = vmatpush.msra.mxu0 %v1365
        %1414 = vmatpush.msra.mxu0 %v1363
        %1415 = vmatpush.msra.mxu0 %v1361
        %1416 = vmatpush.msra.mxu0 %v1359
        %1417 = vmatpush.msra.mxu0 %v1357
        %1418 = vmatpush.msra.mxu0 %v1355
        %1419 = vmatpush.msra.mxu0 %v1353
        %1420 = vmatpush.msra.mxu0 %v1351
        %1421 = vmatpush.msra.mxu0 %v1349
        %1422 = vmatpush.msra.mxu0 %v1347
        %1423 = vmatmul.f32.gmra.mxu0 %v1391
        %v1424 = vpop.f32.mrf.mxu0
        %v1425 = vadd.f32 0.0, %v1424
        %1426 = vmatmul.f32.gmra.mxu0 %v1390
        %v1427 = vpop.f32.mrf.mxu0
        %v1428 = vadd.f32 0.0, %v1427
        %1429 = vdwg.mxu0
        %1430 = vmatpush.msra.mxu0 0.0
        %1431 = vmatpush.msra.mxu0 0.0
        %1432 = vmatpush.msra.mxu0 0.0
        %1433 = vmatpush.msra.mxu0 0.0
        %1434 = vmatpush.msra.mxu0 0.0
        %1435 = vmatpush.msra.mxu0 0.0
        %1436 = vmatpush.msra.mxu0 0.0
        %1437 = vmatpush.msra.mxu0 0.0
        %1438 = vmatpush.msra.mxu0 0.0
        %1439 = vmatpush.msra.mxu0 0.0
        %1440 = vmatpush.msra.mxu0 0.0
        %1441 = vmatpush.msra.mxu0 %v1402
        %1442 = vmatpush.msra.mxu0 %v1385
        %1443 = vmatpush.msra.mxu0 %v1383
        %1444 = vmatpush.msra.mxu0 %v1381
        %1445 = vmatpush.msra.mxu0 %v1379
        %1446 = vmatmul.f32.gmra.mxu0 %v1397
        %v1447 = vpop.f32.mrf.mxu0
        %v1448 = vadd.f32 %v1425, %v1447
        %1449 = vmatmul.f32.gmra.mxu0 %v1399
        %v1450 = vpop.f32.mrf.mxu0
        %v1451 = vadd.f32 %v1428, %v1450
        %1452 = vdwg.mxu0
        %1453 = vmatpush.msra.mxu0 %v1378
        %1454 = vmatpush.msra.mxu0 %v1376
        %1455 = vmatpush.msra.mxu0 %v1374
        %1456 = vmatpush.msra.mxu0 %v1372
        %1457 = vmatpush.msra.mxu0 %v1370
        %1458 = vmatpush.msra.mxu0 %v1368
        %1459 = vmatpush.msra.mxu0 %v1366
        %1460 = vmatpush.msra.mxu0 %v1364
        %1461 = vmatpush.msra.mxu0 %v1362
        %1462 = vmatpush.msra.mxu0 %v1360
        %1463 = vmatpush.msra.mxu0 %v1358
        %1464 = vmatpush.msra.mxu0 %v1356
        %1465 = vmatpush.msra.mxu0 %v1354
        %1466 = vmatpush.msra.mxu0 %v1352
        %1467 = vmatpush.msra.mxu0 %v1350
        %1468 = vmatpush.msra.mxu0 %v1348
        %1469 = vmatmul.f32.gmra.mxu0 %v1391
        %v1470 = vpop.f32.mrf.mxu0
        %v1471 = vadd.f32 0.0, %v1470
        %1472 = vmatmul.f32.gmra.mxu0 %v1390
        %v1473 = vpop.f32.mrf.mxu0
        %v1474 = vadd.f32 0.0, %v1473
        %1475 = vdwg.mxu0
        %1476 = vmatpush.msra.mxu0 0.0
        %1477 = vmatpush.msra.mxu0 0.0
        %1478 = vmatpush.msra.mxu0 0.0
        %1479 = vmatpush.msra.mxu0 0.0
        %1480 = vmatpush.msra.mxu0 0.0
        %1481 = vmatpush.msra.mxu0 0.0
        %1482 = vmatpush.msra.mxu0 0.0
        %1483 = vmatpush.msra.mxu0 0.0
        %1484 = vmatpush.msra.mxu0 0.0
        %1485 = vmatpush.msra.mxu0 0.0
        %1486 = vmatpush.msra.mxu0 0.0
        %1487 = vmatpush.msra.mxu0 %v1405
        %1488 = vmatpush.msra.mxu0 %v1386
        %1489 = vmatpush.msra.mxu0 %v1384
        %1490 = vmatpush.msra.mxu0 %v1382
        %1491 = vmatpush.msra.mxu0 %v1380
        %1492 = vmatmul.f32.gmra.mxu0 %v1397
        %v1493 = vpop.f32.mrf.mxu0
        %v1494 = vadd.f32 %v1471, %v1493
        %1495 = vmatmul.f32.gmra.mxu0 %v1399
        %v1496 = vpop.f32.mrf.mxu0
        %v1497 = vadd.f32 %v1474, %v1496
        %1498 = vdwg.mxu0
        %v1499 = vadd.f32 %v1295, %v1448
        %v1500 = vadd.f32 %v1341, %v1494
        %v1501 = vadd.f32 %v1298, %v1451
        %v1502 = vadd.f32 %v1344, %v1497
        %s1503 = scalar_lea.vmem %s4, 1008
        %v1504 = vld [vmem:[%s1503] sm:$0xff]
        %v1505 = vld [vmem:[%s1503 + $0x8] sm:$0xff]
        %v1506 = vld [vmem:[%s1503 + $0x10] sm:$0xff]
        %v1507 = vld [vmem:[%s1503 + $0x18] sm:$0xff]
        %v1508 = vld [vmem:[%s1503 + $0x20] sm:$0xff]
        %v1509 = vld [vmem:[%s1503 + $0x28] sm:$0xff]
        %v1510 = vld [vmem:[%s1503 + $0x30] sm:$0xff]
        %v1511 = vld [vmem:[%s1503 + $0x38] sm:$0xff]
        %v1512 = vld [vmem:[%s1503 + $0x40] sm:$0xff]
        %v1513 = vld [vmem:[%s1503 + $0x48] sm:$0xff]
        %v1514 = vld [vmem:[%s1503 + $0x50] sm:$0xff]
        %v1515 = vld [vmem:[%s1503 + $0x58] sm:$0xff]
        %v1516 = vld [vmem:[%s1503 + $0x60] sm:$0xff]
        %v1517 = vld [vmem:[%s1503 + $0x68] sm:$0xff]
        %v1518 = vld [vmem:[%s1503 + $0x70] sm:$0xff]
        %v1519 = vld [vmem:[%s1503 + $0x78] sm:$0xff]
        %v1520 = vld [vmem:[%s1503 + $0x80] sm:$0xff]
        %v1521 = vld [vmem:[%s1503 + $0x88] sm:$0xff]
        %v1522 = vld [vmem:[%s1503 + $0x90] sm:$0xff]
        %v1523 = vld [vmem:[%s1503 + $0x98] sm:$0xff]
        %v1524 = vld [vmem:[%s1503 + $0xa0] sm:$0xff]
        %v1525 = vld [vmem:[%s1503 + $0xa8] sm:$0xff]
        %v1526 = vld [vmem:[%s1503 + $0xb0] sm:$0xff]
        %v1527 = vld [vmem:[%s1503 + $0xb8] sm:$0xff]
        %v1528 = vld [vmem:[%s1503 + $0xc0] sm:$0xff]
        %v1529 = vld [vmem:[%s1503 + $0xc8] sm:$0xff]
        %v1530 = vld [vmem:[%s1503 + $0xd0] sm:$0xff]
        %v1531 = vld [vmem:[%s1503 + $0xd8] sm:$0xff]
        %v1532 = vld [vmem:[%s1503 + $0xe0] sm:$0xff]
        %v1533 = vld [vmem:[%s1503 + $0xe8] sm:$0xff]
        %v1534 = vld [vmem:[%s1503 + $0xf0] sm:$0xff]
        %v1535 = vld [vmem:[%s1503 + $0xf8] sm:$0xff]
        %v1536 = vld [vmem:[%s1503 + $0x100] sm:$0xff]
        %v1537 = vld [vmem:[%s1503 + $0x108] sm:$0xff]
        %v1538 = vld [vmem:[%s1503 + $0x110] sm:$0xff]
        %v1539 = vld [vmem:[%s1503 + $0x118] sm:$0xff]
        %v1540 = vld [vmem:[%s1503 + $0x120] sm:$0xff]
        %v1541 = vld [vmem:[%s1503 + $0x128] sm:$0xff]
        %v1542 = vld [vmem:[%s1503 + $0x130] sm:$0xff]
        %v1543 = vld [vmem:[%s1503 + $0x138] sm:$0xff]
        %v1544 = vld [vmem:[%s1503 + $0x140] sm:$0x7f]
        %v1545 = vld [vmem:[%s1503 + $0x148] sm:$0x7f]
        %v1546 = vrot.slane %v1016, 3
        %v1547 = vrot.slane %v1019, 3
        %v1548 = vsel %vm704, %v1546, %v1547
        %v1549 = vrot.slane %v1039, 3
        %v1550 = vrot.slane %v1042, 3
        %v1551 = vsel %vm704, %v1549, %v1550
        %v1554 = vsel %vm1141, %v1551, 0
        %v1556 = vsel %vm1141, %v1550, 0
        %v1559 = vsel %vm463, %v1544, 0
        %v1562 = vsel %vm463, %v1545, 0
        %1564 = vmatpush.msra.mxu0 %v1534
        %1565 = vmatpush.msra.mxu0 %v1532
        %1566 = vmatpush.msra.mxu0 %v1530
        %1567 = vmatpush.msra.mxu0 %v1528
        %1568 = vmatpush.msra.mxu0 %v1526
        %1569 = vmatpush.msra.mxu0 %v1524
        %1570 = vmatpush.msra.mxu0 %v1522
        %1571 = vmatpush.msra.mxu0 %v1520
        %1572 = vmatpush.msra.mxu0 %v1518
        %1573 = vmatpush.msra.mxu0 %v1516
        %1574 = vmatpush.msra.mxu0 %v1514
        %1575 = vmatpush.msra.mxu0 %v1512
        %1576 = vmatpush.msra.mxu0 %v1510
        %1577 = vmatpush.msra.mxu0 %v1508
        %1578 = vmatpush.msra.mxu0 %v1506
        %1579 = vmatpush.msra.mxu0 %v1504
        %1580 = vmatmul.f32.gmra.mxu0 %v1548
        %v1581 = vpop.f32.mrf.mxu0
        %v1582 = vadd.f32 0.0, %v1581
        %1583 = vmatmul.f32.gmra.mxu0 %v1547
        %v1584 = vpop.f32.mrf.mxu0
        %v1585 = vadd.f32 0.0, %v1584
        %1586 = vdwg.mxu0
        %1587 = vmatpush.msra.mxu0 0.0
        %1588 = vmatpush.msra.mxu0 0.0
        %1589 = vmatpush.msra.mxu0 0.0
        %1590 = vmatpush.msra.mxu0 0.0
        %1591 = vmatpush.msra.mxu0 0.0
        %1592 = vmatpush.msra.mxu0 0.0
        %1593 = vmatpush.msra.mxu0 0.0
        %1594 = vmatpush.msra.mxu0 0.0
        %1595 = vmatpush.msra.mxu0 0.0
        %1596 = vmatpush.msra.mxu0 0.0
        %1597 = vmatpush.msra.mxu0 0.0
        %1598 = vmatpush.msra.mxu0 %v1559
        %1599 = vmatpush.msra.mxu0 %v1542
        %1600 = vmatpush.msra.mxu0 %v1540
        %1601 = vmatpush.msra.mxu0 %v1538
        %1602 = vmatpush.msra.mxu0 %v1536
        %1603 = vmatmul.f32.gmra.mxu0 %v1554
        %v1604 = vpop.f32.mrf.mxu0
        %v1605 = vadd.f32 %v1582, %v1604
        %1606 = vmatmul.f32.gmra.mxu0 %v1556
        %v1607 = vpop.f32.mrf.mxu0
        %v1608 = vadd.f32 %v1585, %v1607
        %1609 = vdwg.mxu0
        %1610 = vmatpush.msra.mxu0 %v1535
        %1611 = vmatpush.msra.mxu0 %v1533
        %1612 = vmatpush.msra.mxu0 %v1531
        %1613 = vmatpush.msra.mxu0 %v1529
        %1614 = vmatpush.msra.mxu0 %v1527
        %1615 = vmatpush.msra.mxu0 %v1525
        %1616 = vmatpush.msra.mxu0 %v1523
        %1617 = vmatpush.msra.mxu0 %v1521
        %1618 = vmatpush.msra.mxu0 %v1519
        %1619 = vmatpush.msra.mxu0 %v1517
        %1620 = vmatpush.msra.mxu0 %v1515
        %1621 = vmatpush.msra.mxu0 %v1513
        %1622 = vmatpush.msra.mxu0 %v1511
        %1623 = vmatpush.msra.mxu0 %v1509
        %1624 = vmatpush.msra.mxu0 %v1507
        %1625 = vmatpush.msra.mxu0 %v1505
        %1626 = vmatmul.f32.gmra.mxu0 %v1548
        %v1627 = vpop.f32.mrf.mxu0
        %v1628 = vadd.f32 0.0, %v1627
        %1629 = vmatmul.f32.gmra.mxu0 %v1547
        %v1630 = vpop.f32.mrf.mxu0
        %v1631 = vadd.f32 0.0, %v1630
        %1632 = vdwg.mxu0
        %1633 = vmatpush.msra.mxu0 0.0
        %1634 = vmatpush.msra.mxu0 0.0
        %1635 = vmatpush.msra.mxu0 0.0
        %1636 = vmatpush.msra.mxu0 0.0
        %1637 = vmatpush.msra.mxu0 0.0
        %1638 = vmatpush.msra.mxu0 0.0
        %1639 = vmatpush.msra.mxu0 0.0
        %1640 = vmatpush.msra.mxu0 0.0
        %1641 = vmatpush.msra.mxu0 0.0
        %1642 = vmatpush.msra.mxu0 0.0
        %1643 = vmatpush.msra.mxu0 0.0
        %1644 = vmatpush.msra.mxu0 %v1562
        %1645 = vmatpush.msra.mxu0 %v1543
        %1646 = vmatpush.msra.mxu0 %v1541
        %1647 = vmatpush.msra.mxu0 %v1539
        %1648 = vmatpush.msra.mxu0 %v1537
        %1649 = vmatmul.f32.gmra.mxu0 %v1554
        %v1650 = vpop.f32.mrf.mxu0
        %v1651 = vadd.f32 %v1628, %v1650
        %1652 = vmatmul.f32.gmra.mxu0 %v1556
        %v1653 = vpop.f32.mrf.mxu0
        %v1654 = vadd.f32 %v1631, %v1653
        %1655 = vdwg.mxu0
        %v1656 = vadd.f32 %v1499, %v1605
        %v1657 = vadd.f32 %v1500, %v1651
        %v1658 = vadd.f32 %v1501, %v1608
        %v1659 = vadd.f32 %v1502, %v1654
        %s1660 = scalar_lea.vmem %s4, 1344
        %v1661 = vld [vmem:[%s1660] sm:$0xff]
        %v1662 = vld [vmem:[%s1660 + $0x8] sm:$0xff]
        %v1663 = vld [vmem:[%s1660 + $0x10] sm:$0xff]
        %v1664 = vld [vmem:[%s1660 + $0x18] sm:$0xff]
        %v1665 = vld [vmem:[%s1660 + $0x20] sm:$0xff]
        %v1666 = vld [vmem:[%s1660 + $0x28] sm:$0xff]
        %v1667 = vld [vmem:[%s1660 + $0x30] sm:$0xff]
        %v1668 = vld [vmem:[%s1660 + $0x38] sm:$0xff]
        %v1669 = vld [vmem:[%s1660 + $0x40] sm:$0xff]
        %v1670 = vld [vmem:[%s1660 + $0x48] sm:$0xff]
        %v1671 = vld [vmem:[%s1660 + $0x50] sm:$0xff]
        %v1672 = vld [vmem:[%s1660 + $0x58] sm:$0xff]
        %v1673 = vld [vmem:[%s1660 + $0x60] sm:$0xff]
        %v1674 = vld [vmem:[%s1660 + $0x68] sm:$0xff]
        %v1675 = vld [vmem:[%s1660 + $0x70] sm:$0xff]
        %v1676 = vld [vmem:[%s1660 + $0x78] sm:$0xff]
        %v1677 = vld [vmem:[%s1660 + $0x80] sm:$0xff]
        %v1678 = vld [vmem:[%s1660 + $0x88] sm:$0xff]
        %v1679 = vld [vmem:[%s1660 + $0x90] sm:$0xff]
        %v1680 = vld [vmem:[%s1660 + $0x98] sm:$0xff]
        %v1681 = vld [vmem:[%s1660 + $0xa0] sm:$0xff]
        %v1682 = vld [vmem:[%s1660 + $0xa8] sm:$0xff]
        %v1683 = vld [vmem:[%s1660 + $0xb0] sm:$0xff]
        %v1684 = vld [vmem:[%s1660 + $0xb8] sm:$0xff]
        %v1685 = vld [vmem:[%s1660 + $0xc0] sm:$0xff]
        %v1686 = vld [vmem:[%s1660 + $0xc8] sm:$0xff]
        %v1687 = vld [vmem:[%s1660 + $0xd0] sm:$0xff]
        %v1688 = vld [vmem:[%s1660 + $0xd8] sm:$0xff]
        %v1689 = vld [vmem:[%s1660 + $0xe0] sm:$0xff]
        %v1690 = vld [vmem:[%s1660 + $0xe8] sm:$0xff]
        %v1691 = vld [vmem:[%s1660 + $0xf0] sm:$0xff]
        %v1692 = vld [vmem:[%s1660 + $0xf8] sm:$0xff]
        %v1693 = vld [vmem:[%s1660 + $0x100] sm:$0xff]
        %v1694 = vld [vmem:[%s1660 + $0x108] sm:$0xff]
        %v1695 = vld [vmem:[%s1660 + $0x110] sm:$0xff]
        %v1696 = vld [vmem:[%s1660 + $0x118] sm:$0xff]
        %v1697 = vld [vmem:[%s1660 + $0x120] sm:$0xff]
        %v1698 = vld [vmem:[%s1660 + $0x128] sm:$0xff]
        %v1699 = vld [vmem:[%s1660 + $0x130] sm:$0xff]
        %v1700 = vld [vmem:[%s1660 + $0x138] sm:$0xff]
        %v1701 = vld [vmem:[%s1660 + $0x140] sm:$0x7f]
        %v1702 = vld [vmem:[%s1660 + $0x148] sm:$0x7f]
        %v1703 = vrot.slane %v1016, 4
        %v1704 = vrot.slane %v1019, 4
        %v1705 = vsel %vm795, %v1703, %v1704
        %v1706 = vrot.slane %v1039, 4
        %v1707 = vrot.slane %v1042, 4
        %v1708 = vsel %vm795, %v1706, %v1707
        %v1711 = vsel %vm1141, %v1708, 0
        %v1713 = vsel %vm1141, %v1707, 0
        %v1716 = vsel %vm463, %v1701, 0
        %v1719 = vsel %vm463, %v1702, 0
        %1721 = vmatpush.msra.mxu0 %v1691
        %1722 = vmatpush.msra.mxu0 %v1689
        %1723 = vmatpush.msra.mxu0 %v1687
        %1724 = vmatpush.msra.mxu0 %v1685
        %1725 = vmatpush.msra.mxu0 %v1683
        %1726 = vmatpush.msra.mxu0 %v1681
        %1727 = vmatpush.msra.mxu0 %v1679
        %1728 = vmatpush.msra.mxu0 %v1677
        %1729 = vmatpush.msra.mxu0 %v1675
        %1730 = vmatpush.msra.mxu0 %v1673
        %1731 = vmatpush.msra.mxu0 %v1671
        %1732 = vmatpush.msra.mxu0 %v1669
        %1733 = vmatpush.msra.mxu0 %v1667
        %1734 = vmatpush.msra.mxu0 %v1665
        %1735 = vmatpush.msra.mxu0 %v1663
        %1736 = vmatpush.msra.mxu0 %v1661
        %1737 = vmatmul.f32.gmra.mxu0 %v1705
        %v1738 = vpop.f32.mrf.mxu0
        %v1739 = vadd.f32 0.0, %v1738
        %1740 = vmatmul.f32.gmra.mxu0 %v1704
        %v1741 = vpop.f32.mrf.mxu0
        %v1742 = vadd.f32 0.0, %v1741
        %1743 = vdwg.mxu0
        %1744 = vmatpush.msra.mxu0 0.0
        %1745 = vmatpush.msra.mxu0 0.0
        %1746 = vmatpush.msra.mxu0 0.0
        %1747 = vmatpush.msra.mxu0 0.0
        %1748 = vmatpush.msra.mxu0 0.0
        %1749 = vmatpush.msra.mxu0 0.0
        %1750 = vmatpush.msra.mxu0 0.0
        %1751 = vmatpush.msra.mxu0 0.0
        %1752 = vmatpush.msra.mxu0 0.0
        %1753 = vmatpush.msra.mxu0 0.0
        %1754 = vmatpush.msra.mxu0 0.0
        %1755 = vmatpush.msra.mxu0 %v1716
        %1756 = vmatpush.msra.mxu0 %v1699
        %1757 = vmatpush.msra.mxu0 %v1697
        %1758 = vmatpush.msra.mxu0 %v1695
        %1759 = vmatpush.msra.mxu0 %v1693
        %1760 = vmatmul.f32.gmra.mxu0 %v1711
        %v1761 = vpop.f32.mrf.mxu0
        %v1762 = vadd.f32 %v1739, %v1761
        %1763 = vmatmul.f32.gmra.mxu0 %v1713
        %v1764 = vpop.f32.mrf.mxu0
        %v1765 = vadd.f32 %v1742, %v1764
        %1766 = vdwg.mxu0
        %1767 = vmatpush.msra.mxu0 %v1692
        %1768 = vmatpush.msra.mxu0 %v1690
        %1769 = vmatpush.msra.mxu0 %v1688
        %1770 = vmatpush.msra.mxu0 %v1686
        %1771 = vmatpush.msra.mxu0 %v1684
        %1772 = vmatpush.msra.mxu0 %v1682
        %1773 = vmatpush.msra.mxu0 %v1680
        %1774 = vmatpush.msra.mxu0 %v1678
        %1775 = vmatpush.msra.mxu0 %v1676
        %1776 = vmatpush.msra.mxu0 %v1674
        %1777 = vmatpush.msra.mxu0 %v1672
        %1778 = vmatpush.msra.mxu0 %v1670
        %1779 = vmatpush.msra.mxu0 %v1668
        %1780 = vmatpush.msra.mxu0 %v1666
        %1781 = vmatpush.msra.mxu0 %v1664
        %1782 = vmatpush.msra.mxu0 %v1662
        %1783 = vmatmul.f32.gmra.mxu0 %v1705
        %v1784 = vpop.f32.mrf.mxu0
        %v1785 = vadd.f32 0.0, %v1784
        %1786 = vmatmul.f32.gmra.mxu0 %v1704
        %v1787 = vpop.f32.mrf.mxu0
        %v1788 = vadd.f32 0.0, %v1787
        %1789 = vdwg.mxu0
        %1790 = vmatpush.msra.mxu0 0.0
        %1791 = vmatpush.msra.mxu0 0.0
        %1792 = vmatpush.msra.mxu0 0.0
        %1793 = vmatpush.msra.mxu0 0.0
        %1794 = vmatpush.msra.mxu0 0.0
        %1795 = vmatpush.msra.mxu0 0.0
        %1796 = vmatpush.msra.mxu0 0.0
        %1797 = vmatpush.msra.mxu0 0.0
        %1798 = vmatpush.msra.mxu0 0.0
        %1799 = vmatpush.msra.mxu0 0.0
        %1800 = vmatpush.msra.mxu0 0.0
        %1801 = vmatpush.msra.mxu0 %v1719
        %1802 = vmatpush.msra.mxu0 %v1700
        %1803 = vmatpush.msra.mxu0 %v1698
        %1804 = vmatpush.msra.mxu0 %v1696
        %1805 = vmatpush.msra.mxu0 %v1694
        %1806 = vmatmul.f32.gmra.mxu0 %v1711
        %v1807 = vpop.f32.mrf.mxu0
        %v1808 = vadd.f32 %v1785, %v1807
        %1809 = vmatmul.f32.gmra.mxu0 %v1713
        %v1810 = vpop.f32.mrf.mxu0
        %v1811 = vadd.f32 %v1788, %v1810
        %1812 = vdwg.mxu0
        %v1813 = vadd.f32 %v1656, %v1762
        %v1814 = vadd.f32 %v1657, %v1808
        %v1815 = vadd.f32 %v1658, %v1765
        %v1816 = vadd.f32 %v1659, %v1811
        %v1817 = vld [vmem:[%s5] sm:$0x3]
        %v1819 = vperm.slane %v1817, 0
        %v1820 = vperm.slane %v1817, 1
        %v1823 = vadd.f32 %v1813, %v1819
        %v1824 = vadd.f32 %v1814, %v1820
        %v1825 = vadd.f32 %v1815, %v1819
        %v1826 = vadd.f32 %v1816, %v1820
        %v1827 = vmax.f32 %v1823, 0.0
        %v1828 = vmax.f32 %v1824, 0.0
        %v1829 = vmax.f32 %v1825, 0.0
        %v1830 = vmax.f32 %v1826, 0.0
        %v1835 = vrot.slane %v1827, 1
        %v1836 = vrot.slane %v1829, 1
        %v1837 = vsel %vm463, %v1835, %v1836
        %v1838 = vrot.slane %v1828, 1
        %v1839 = vrot.slane %v1830, 1
        %v1840 = vsel %vm463, %v1838, %v1839
        %v1845 = vmax.f32 %v1827, %v1837
        %v1846 = vmax.f32 %v1828, %v1840
        %v1847 = vmax.f32 %v1829, %v1836
        %v1848 = vmax.f32 %v1830, %v1839
        %1853 = vrot.lane.b32.xlu0 %v1845, 127
        %v1854 = vpop.permute.xlu0 %1853
        %1855 = vrot.lane.b32.xlu0 %v1846, 127
        %v1856 = vpop.permute.xlu0 %1855
        %1857 = vrot.lane.b32.xlu0 %v1847, 127
        %v1858 = vpop.permute.xlu0 %1857
        %1859 = vrot.lane.b32.xlu0 %v1848, 127
        %v1860 = vpop.permute.xlu0 %1859
        %v1861 = vsel %vm961, %v1854, %v1856
        %v1862 = vsel %vm961, %v1858, %v1860
        %v1867 = vmax.f32 %v1845, %v1861
        %v1868 = vmax.f32 %v1846, %v1856
        %v1869 = vmax.f32 %v1847, %v1862
        %v1870 = vmax.f32 %v1848, %v1860
        %v1871 = vld [vmem:[%s6] sm:$0x1f]
        %vm1872 = vcmask 72704
        %v1874 = vsel %vm1872, %v1871, 0
        %vm1876 = vcmask 1040384
        %v1878 = vsel %vm1876, %v1869, 0
        %v1881 = vsel %vm1876, %v1870, 0
        %1883 = vmatpush.msra.mxu0 0.0
        %1884 = vmatpush.msra.mxu0 0.0
        %1885 = vmatpush.msra.mxu0 0.0
        %1886 = vmatpush.msra.mxu0 0.0
        %1887 = vmatpush.msra.mxu0 0.0
        %1888 = vmatpush.msra.mxu0 0.0
        %1889 = vmatpush.msra.mxu0 0.0
        %1890 = vmatpush.msra.mxu0 0.0
        %1891 = vmatpush.msra.mxu0 0.0
        %1892 = vmatpush.msra.mxu0 0.0
        %1893 = vmatpush.msra.mxu0 0.0
        %1894 = vmatpush.msra.mxu0 0.0
        %1895 = vmatpush.msra.mxu0 0.0
        %1896 = vmatpush.msra.mxu0 0.0
        %1897 = vmatpush.msra.mxu0 %v1878
        %1898 = vmatpush.msra.mxu0 %v1867
        %1899 = vmatmul.f32.gmra.mxu0 %v1874
        %v1900 = vpop.f32.mrf.mxu0
        %v1901 = vadd.f32 0.0, %v1900
        %1902 = vdwg.mxu0
        %1903 = vmatpush.msra.mxu0 0.0
        %1904 = vmatpush.msra.mxu0 0.0
        %1905 = vmatpush.msra.mxu0 0.0
        %1906 = vmatpush.msra.mxu0 0.0
        %1907 = vmatpush.msra.mxu0 0.0
        %1908 = vmatpush.msra.mxu0 0.0
        %1909 = vmatpush.msra.mxu0 0.0
        %1910 = vmatpush.msra.mxu0 0.0
        %1911 = vmatpush.msra.mxu0 0.0
        %1912 = vmatpush.msra.mxu0 0.0
        %1913 = vmatpush.msra.mxu0 0.0
        %1914 = vmatpush.msra.mxu0 0.0
        %1915 = vmatpush.msra.mxu0 0.0
        %1916 = vmatpush.msra.mxu0 0.0
        %1917 = vmatpush.msra.mxu0 %v1881
        %1918 = vmatpush.msra.mxu0 %v1868
        %1919 = vmatmul.f32.gmra.mxu0 %v1874
        %v1920 = vpop.f32.mrf.mxu0
        %v1921 = vadd.f32 0.0, %v1920
        %1922 = vdwg.mxu0
        %v1923 = vld [vmem:[%s7] sm:$0xff]
        %v1924 = vld [vmem:[%s7 + $0x8] sm:$0xff]
        %v1925 = vld [vmem:[%s7 + $0x10] sm:$0xff]
        %v1926 = vld [vmem:[%s7 + $0x18] sm:$0xff]
        %v1927 = vld [vmem:[%s7 + $0x20] sm:$0xff]
        %v1928 = vld [vmem:[%s7 + $0x28] sm:$0xff]
        %v1929 = vld [vmem:[%s7 + $0x30] sm:$0xff]
        %v1930 = vld [vmem:[%s7 + $0x38] sm:$0xff]
        %v1931 = vld [vmem:[%s7 + $0x40] sm:$0xff]
        %v1932 = vld [vmem:[%s7 + $0x48] sm:$0xff]
        %v1933 = vld [vmem:[%s7 + $0x50] sm:$0xff]
        %v1934 = vld [vmem:[%s7 + $0x58] sm:$0xff]
        %v1935 = vld [vmem:[%s7 + $0x60] sm:$0xff]
        %v1936 = vld [vmem:[%s7 + $0x68] sm:$0xff]
        %v1937 = vld [vmem:[%s7 + $0x70] sm:$0xff]
        %v1938 = vld [vmem:[%s7 + $0x78] sm:$0xff]
        %v1939 = vld [vmem:[%s7 + $0x80] sm:$0xff]
        %v1940 = vld [vmem:[%s7 + $0x88] sm:$0xff]
        %v1941 = vld [vmem:[%s7 + $0x90] sm:$0xff]
        %v1942 = vld [vmem:[%s7 + $0x98] sm:$0x7f]
        %s1943 = scalar_lea.vmem %s7, 160
        %v1944 = vld [vmem:[%s1943] sm:$0xff]
        %v1945 = vld [vmem:[%s1943 + $0x8] sm:$0xff]
        %v1946 = vld [vmem:[%s1943 + $0x10] sm:$0xff]
        %v1947 = vld [vmem:[%s1943 + $0x18] sm:$0xff]
        %v1948 = vld [vmem:[%s1943 + $0x20] sm:$0xff]
        %v1949 = vld [vmem:[%s1943 + $0x28] sm:$0xff]
        %v1950 = vld [vmem:[%s1943 + $0x30] sm:$0xff]
        %v1951 = vld [vmem:[%s1943 + $0x38] sm:$0xff]
        %v1952 = vld [vmem:[%s1943 + $0x40] sm:$0xff]
        %v1953 = vld [vmem:[%s1943 + $0x48] sm:$0xff]
        %v1954 = vld [vmem:[%s1943 + $0x50] sm:$0xff]
        %v1955 = vld [vmem:[%s1943 + $0x58] sm:$0xff]
        %v1956 = vld [vmem:[%s1943 + $0x60] sm:$0xff]
        %v1957 = vld [vmem:[%s1943 + $0x68] sm:$0xff]
        %v1958 = vld [vmem:[%s1943 + $0x70] sm:$0xff]
        %v1959 = vld [vmem:[%s1943 + $0x78] sm:$0xff]
        %v1960 = vld [vmem:[%s1943 + $0x80] sm:$0xff]
        %v1961 = vld [vmem:[%s1943 + $0x88] sm:$0xff]
        %v1962 = vld [vmem:[%s1943 + $0x90] sm:$0xff]
        %v1963 = vld [vmem:[%s1943 + $0x98] sm:$0x7f]
        %v1966 = vrot.slane %v1901, 1
        %v1967 = vrot.slane %v1921, 1
        %vm1969 = vcmask 252928
        %v1970 = vsel %vm1969, %v1967, 0
        %v1973 = vsel %vm463, %v1963, 0
        %1975 = vmatpush.msra.mxu0 %v1959
        %1976 = vmatpush.msra.mxu0 %v1958
        %1977 = vmatpush.msra.mxu0 %v1957
        %1978 = vmatpush.msra.mxu0 %v1956
        %1979 = vmatpush.msra.mxu0 %v1955
        %1980 = vmatpush.msra.mxu0 %v1954
        %1981 = vmatpush.msra.mxu0 %v1953
        %1982 = vmatpush.msra.mxu0 %v1952
        %1983 = vmatpush.msra.mxu0 %v1951
        %1984 = vmatpush.msra.mxu0 %v1950
        %1985 = vmatpush.msra.mxu0 %v1949
        %1986 = vmatpush.msra.mxu0 %v1948
        %1987 = vmatpush.msra.mxu0 %v1947
        %1988 = vmatpush.msra.mxu0 %v1946
        %1989 = vmatpush.msra.mxu0 %v1945
        %1990 = vmatpush.msra.mxu0 %v1944
        %1991 = vmatmul.f32.gmra.mxu0 %v1966
        %v1992 = vpop.f32.mrf.mxu0
        %v1993 = vadd.f32 0.0, %v1992
        %1994 = vdwg.mxu0
        %1995 = vmatpush.msra.mxu0 0.0
        %1996 = vmatpush.msra.mxu0 0.0
        %1997 = vmatpush.msra.mxu0 0.0
        %1998 = vmatpush.msra.mxu0 0.0
        %1999 = vmatpush.msra.mxu0 0.0
        %2000 = vmatpush.msra.mxu0 0.0
        %2001 = vmatpush.msra.mxu0 0.0
        %2002 = vmatpush.msra.mxu0 0.0
        %2003 = vmatpush.msra.mxu0 0.0
        %2004 = vmatpush.msra.mxu0 0.0
        %2005 = vmatpush.msra.mxu0 0.0
        %2006 = vmatpush.msra.mxu0 0.0
        %2007 = vmatpush.msra.mxu0 %v1973
        %2008 = vmatpush.msra.mxu0 %v1962
        %2009 = vmatpush.msra.mxu0 %v1961
        %2010 = vmatpush.msra.mxu0 %v1960
        %2011 = vmatmul.f32.gmra.mxu0 %v1970
        %v2012 = vpop.f32.mrf.mxu0
        %v2013 = vadd.f32 %v1993, %v2012
        %2014 = vdwg.mxu0
        %v2015 = vsel %vm1969, %v1921, 0
        %v2018 = vsel %vm463, %v1942, 0
        %2020 = vmatpush.msra.mxu0 %v1938
        %2021 = vmatpush.msra.mxu0 %v1937
        %2022 = vmatpush.msra.mxu0 %v1936
        %2023 = vmatpush.msra.mxu0 %v1935
        %2024 = vmatpush.msra.mxu0 %v1934
        %2025 = vmatpush.msra.mxu0 %v1933
        %2026 = vmatpush.msra.mxu0 %v1932
        %2027 = vmatpush.msra.mxu0 %v1931
        %2028 = vmatpush.msra.mxu0 %v1930
        %2029 = vmatpush.msra.mxu0 %v1929
        %2030 = vmatpush.msra.mxu0 %v1928
        %2031 = vmatpush.msra.mxu0 %v1927
        %2032 = vmatpush.msra.mxu0 %v1926
        %2033 = vmatpush.msra.mxu0 %v1925
        %2034 = vmatpush.msra.mxu0 %v1924
        %2035 = vmatpush.msra.mxu0 %v1923
        %2036 = vmatmul.f32.gmra.mxu0 %v1901
        %v2037 = vpop.f32.mrf.mxu0
        %v2038 = vadd.f32 %v2013, %v2037
        %2039 = vdwg.mxu0
        %2040 = vmatpush.msra.mxu0 0.0
        %2041 = vmatpush.msra.mxu0 0.0
        %2042 = vmatpush.msra.mxu0 0.0
        %2043 = vmatpush.msra.mxu0 0.0
        %2044 = vmatpush.msra.mxu0 0.0
        %2045 = vmatpush.msra.mxu0 0.0
        %2046 = vmatpush.msra.mxu0 0.0
        %2047 = vmatpush.msra.mxu0 0.0
        %2048 = vmatpush.msra.mxu0 0.0
        %2049 = vmatpush.msra.mxu0 0.0
        %2050 = vmatpush.msra.mxu0 0.0
        %2051 = vmatpush.msra.mxu0 0.0
        %2052 = vmatpush.msra.mxu0 %v2018
        %2053 = vmatpush.msra.mxu0 %v1941
        %2054 = vmatpush.msra.mxu0 %v1940
        %2055 = vmatpush.msra.mxu0 %v1939
        %2056 = vmatmul.f32.gmra.mxu0 %v2015
        %v2057 = vpop.f32.mrf.mxu0
        %v2058 = vadd.f32 %v2038, %v2057
        %2059 = vdwg.mxu0
        %s2060 = scalar_lea.vmem %s7, 320
        %v2061 = vld [vmem:[%s2060] sm:$0xff]
        %v2062 = vld [vmem:[%s2060 + $0x8] sm:$0xff]
        %v2063 = vld [vmem:[%s2060 + $0x10] sm:$0xff]
        %v2064 = vld [vmem:[%s2060 + $0x18] sm:$0xff]
        %v2065 = vld [vmem:[%s2060 + $0x20] sm:$0xff]
        %v2066 = vld [vmem:[%s2060 + $0x28] sm:$0xff]
        %v2067 = vld [vmem:[%s2060 + $0x30] sm:$0xff]
        %v2068 = vld [vmem:[%s2060 + $0x38] sm:$0xff]
        %v2069 = vld [vmem:[%s2060 + $0x40] sm:$0xff]
        %v2070 = vld [vmem:[%s2060 + $0x48] sm:$0xff]
        %v2071 = vld [vmem:[%s2060 + $0x50] sm:$0xff]
        %v2072 = vld [vmem:[%s2060 + $0x58] sm:$0xff]
        %v2073 = vld [vmem:[%s2060 + $0x60] sm:$0xff]
        %v2074 = vld [vmem:[%s2060 + $0x68] sm:$0xff]
        %v2075 = vld [vmem:[%s2060 + $0x70] sm:$0xff]
        %v2076 = vld [vmem:[%s2060 + $0x78] sm:$0xff]
        %v2077 = vld [vmem:[%s2060 + $0x80] sm:$0xff]
        %v2078 = vld [vmem:[%s2060 + $0x88] sm:$0xff]
        %v2079 = vld [vmem:[%s2060 + $0x90] sm:$0xff]
        %v2080 = vld [vmem:[%s2060 + $0x98] sm:$0x7f]
        %v2081 = vrot.slane %v1901, 2
        %v2082 = vrot.slane %v1921, 2
        %v2084 = vsel %vm1969, %v2082, 0
        %v2087 = vsel %vm463, %v2080, 0
        %2089 = vmatpush.msra.mxu0 %v2076
        %2090 = vmatpush.msra.mxu0 %v2075
        %2091 = vmatpush.msra.mxu0 %v2074
        %2092 = vmatpush.msra.mxu0 %v2073
        %2093 = vmatpush.msra.mxu0 %v2072
        %2094 = vmatpush.msra.mxu0 %v2071
        %2095 = vmatpush.msra.mxu0 %v2070
        %2096 = vmatpush.msra.mxu0 %v2069
        %2097 = vmatpush.msra.mxu0 %v2068
        %2098 = vmatpush.msra.mxu0 %v2067
        %2099 = vmatpush.msra.mxu0 %v2066
        %2100 = vmatpush.msra.mxu0 %v2065
        %2101 = vmatpush.msra.mxu0 %v2064
        %2102 = vmatpush.msra.mxu0 %v2063
        %2103 = vmatpush.msra.mxu0 %v2062
        %2104 = vmatpush.msra.mxu0 %v2061
        %2105 = vmatmul.f32.gmra.mxu0 %v2081
        %v2106 = vpop.f32.mrf.mxu0
        %v2107 = vadd.f32 0.0, %v2106
        %2108 = vdwg.mxu0
        %2109 = vmatpush.msra.mxu0 0.0
        %2110 = vmatpush.msra.mxu0 0.0
        %2111 = vmatpush.msra.mxu0 0.0
        %2112 = vmatpush.msra.mxu0 0.0
        %2113 = vmatpush.msra.mxu0 0.0
        %2114 = vmatpush.msra.mxu0 0.0
        %2115 = vmatpush.msra.mxu0 0.0
        %2116 = vmatpush.msra.mxu0 0.0
        %2117 = vmatpush.msra.mxu0 0.0
        %2118 = vmatpush.msra.mxu0 0.0
        %2119 = vmatpush.msra.mxu0 0.0
        %2120 = vmatpush.msra.mxu0 0.0
        %2121 = vmatpush.msra.mxu0 %v2087
        %2122 = vmatpush.msra.mxu0 %v2079
        %2123 = vmatpush.msra.mxu0 %v2078
        %2124 = vmatpush.msra.mxu0 %v2077
        %2125 = vmatmul.f32.gmra.mxu0 %v2084
        %v2126 = vpop.f32.mrf.mxu0
        %v2127 = vadd.f32 %v2107, %v2126
        %2128 = vdwg.mxu0
        %v2129 = vadd.f32 %v2058, %v2127
        %s2130 = scalar_lea.vmem %s7, 480
        %v2131 = vld [vmem:[%s2130] sm:$0xff]
        %v2132 = vld [vmem:[%s2130 + $0x8] sm:$0xff]
        %v2133 = vld [vmem:[%s2130 + $0x10] sm:$0xff]
        %v2134 = vld [vmem:[%s2130 + $0x18] sm:$0xff]
        %v2135 = vld [vmem:[%s2130 + $0x20] sm:$0xff]
        %v2136 = vld [vmem:[%s2130 + $0x28] sm:$0xff]
        %v2137 = vld [vmem:[%s2130 + $0x30] sm:$0xff]
        %v2138 = vld [vmem:[%s2130 + $0x38] sm:$0xff]
        %v2139 = vld [vmem:[%s2130 + $0x40] sm:$0xff]
        %v2140 = vld [vmem:[%s2130 + $0x48] sm:$0xff]
        %v2141 = vld [vmem:[%s2130 + $0x50] sm:$0xff]
        %v2142 = vld [vmem:[%s2130 + $0x58] sm:$0xff]
        %v2143 = vld [vmem:[%s2130 + $0x60] sm:$0xff]
        %v2144 = vld [vmem:[%s2130 + $0x68] sm:$0xff]
        %v2145 = vld [vmem:[%s2130 + $0x70] sm:$0xff]
        %v2146 = vld [vmem:[%s2130 + $0x78] sm:$0xff]
        %v2147 = vld [vmem:[%s2130 + $0x80] sm:$0xff]
        %v2148 = vld [vmem:[%s2130 + $0x88] sm:$0xff]
        %v2149 = vld [vmem:[%s2130 + $0x90] sm:$0xff]
        %v2150 = vld [vmem:[%s2130 + $0x98] sm:$0x7f]
        %v2151 = vrot.slane %v1901, 3
        %v2152 = vrot.slane %v1921, 3
        %v2154 = vsel %vm1969, %v2152, 0
        %v2157 = vsel %vm463, %v2150, 0
        %2159 = vmatpush.msra.mxu0 %v2146
        %2160 = vmatpush.msra.mxu0 %v2145
        %2161 = vmatpush.msra.mxu0 %v2144
        %2162 = vmatpush.msra.mxu0 %v2143
        %2163 = vmatpush.msra.mxu0 %v2142
        %2164 = vmatpush.msra.mxu0 %v2141
        %2165 = vmatpush.msra.mxu0 %v2140
        %2166 = vmatpush.msra.mxu0 %v2139
        %2167 = vmatpush.msra.mxu0 %v2138
        %2168 = vmatpush.msra.mxu0 %v2137
        %2169 = vmatpush.msra.mxu0 %v2136
        %2170 = vmatpush.msra.mxu0 %v2135
        %2171 = vmatpush.msra.mxu0 %v2134
        %2172 = vmatpush.msra.mxu0 %v2133
        %2173 = vmatpush.msra.mxu0 %v2132
        %2174 = vmatpush.msra.mxu0 %v2131
        %2175 = vmatmul.f32.gmra.mxu0 %v2151
        %v2176 = vpop.f32.mrf.mxu0
        %v2177 = vadd.f32 0.0, %v2176
        %2178 = vdwg.mxu0
        %2179 = vmatpush.msra.mxu0 0.0
        %2180 = vmatpush.msra.mxu0 0.0
        %2181 = vmatpush.msra.mxu0 0.0
        %2182 = vmatpush.msra.mxu0 0.0
        %2183 = vmatpush.msra.mxu0 0.0
        %2184 = vmatpush.msra.mxu0 0.0
        %2185 = vmatpush.msra.mxu0 0.0
        %2186 = vmatpush.msra.mxu0 0.0
        %2187 = vmatpush.msra.mxu0 0.0
        %2188 = vmatpush.msra.mxu0 0.0
        %2189 = vmatpush.msra.mxu0 0.0
        %2190 = vmatpush.msra.mxu0 0.0
        %2191 = vmatpush.msra.mxu0 %v2157
        %2192 = vmatpush.msra.mxu0 %v2149
        %2193 = vmatpush.msra.mxu0 %v2148
        %2194 = vmatpush.msra.mxu0 %v2147
        %2195 = vmatmul.f32.gmra.mxu0 %v2154
        %v2196 = vpop.f32.mrf.mxu0
        %v2197 = vadd.f32 %v2177, %v2196
        %2198 = vdwg.mxu0
        %v2199 = vadd.f32 %v2129, %v2197
        %s2200 = scalar_lea.vmem %s7, 640
        %v2201 = vld [vmem:[%s2200] sm:$0xff]
        %v2202 = vld [vmem:[%s2200 + $0x8] sm:$0xff]
        %v2203 = vld [vmem:[%s2200 + $0x10] sm:$0xff]
        %v2204 = vld [vmem:[%s2200 + $0x18] sm:$0xff]
        %v2205 = vld [vmem:[%s2200 + $0x20] sm:$0xff]
        %v2206 = vld [vmem:[%s2200 + $0x28] sm:$0xff]
        %v2207 = vld [vmem:[%s2200 + $0x30] sm:$0xff]
        %v2208 = vld [vmem:[%s2200 + $0x38] sm:$0xff]
        %v2209 = vld [vmem:[%s2200 + $0x40] sm:$0xff]
        %v2210 = vld [vmem:[%s2200 + $0x48] sm:$0xff]
        %v2211 = vld [vmem:[%s2200 + $0x50] sm:$0xff]
        %v2212 = vld [vmem:[%s2200 + $0x58] sm:$0xff]
        %v2213 = vld [vmem:[%s2200 + $0x60] sm:$0xff]
        %v2214 = vld [vmem:[%s2200 + $0x68] sm:$0xff]
        %v2215 = vld [vmem:[%s2200 + $0x70] sm:$0xff]
        %v2216 = vld [vmem:[%s2200 + $0x78] sm:$0xff]
        %v2217 = vld [vmem:[%s2200 + $0x80] sm:$0xff]
        %v2218 = vld [vmem:[%s2200 + $0x88] sm:$0xff]
        %v2219 = vld [vmem:[%s2200 + $0x90] sm:$0xff]
        %v2220 = vld [vmem:[%s2200 + $0x98] sm:$0x7f]
        %v2221 = vrot.slane %v1901, 4
        %v2222 = vrot.slane %v1921, 4
        %v2224 = vsel %vm1969, %v2222, 0
        %v2227 = vsel %vm463, %v2220, 0
        %2229 = vmatpush.msra.mxu0 %v2216
        %2230 = vmatpush.msra.mxu0 %v2215
        %2231 = vmatpush.msra.mxu0 %v2214
        %2232 = vmatpush.msra.mxu0 %v2213
        %2233 = vmatpush.msra.mxu0 %v2212
        %2234 = vmatpush.msra.mxu0 %v2211
        %2235 = vmatpush.msra.mxu0 %v2210
        %2236 = vmatpush.msra.mxu0 %v2209
        %2237 = vmatpush.msra.mxu0 %v2208
        %2238 = vmatpush.msra.mxu0 %v2207
        %2239 = vmatpush.msra.mxu0 %v2206
        %2240 = vmatpush.msra.mxu0 %v2205
        %2241 = vmatpush.msra.mxu0 %v2204
        %2242 = vmatpush.msra.mxu0 %v2203
        %2243 = vmatpush.msra.mxu0 %v2202
        %2244 = vmatpush.msra.mxu0 %v2201
        %2245 = vmatmul.f32.gmra.mxu0 %v2221
        %v2246 = vpop.f32.mrf.mxu0
        %v2247 = vadd.f32 0.0, %v2246
        %2248 = vdwg.mxu0
        %2249 = vmatpush.msra.mxu0 0.0
        %2250 = vmatpush.msra.mxu0 0.0
        %2251 = vmatpush.msra.mxu0 0.0
        %2252 = vmatpush.msra.mxu0 0.0
        %2253 = vmatpush.msra.mxu0 0.0
        %2254 = vmatpush.msra.mxu0 0.0
        %2255 = vmatpush.msra.mxu0 0.0
        %2256 = vmatpush.msra.mxu0 0.0
        %2257 = vmatpush.msra.mxu0 0.0
        %2258 = vmatpush.msra.mxu0 0.0
        %2259 = vmatpush.msra.mxu0 0.0
        %2260 = vmatpush.msra.mxu0 0.0
        %2261 = vmatpush.msra.mxu0 %v2227
        %2262 = vmatpush.msra.mxu0 %v2219
        %2263 = vmatpush.msra.mxu0 %v2218
        %2264 = vmatpush.msra.mxu0 %v2217
        %2265 = vmatmul.f32.gmra.mxu0 %v2224
        %v2266 = vpop.f32.mrf.mxu0
        %v2267 = vadd.f32 %v2247, %v2266
        %2268 = vdwg.mxu0
        %v2269 = vadd.f32 %v2199, %v2267
        %v2270 = vld [vmem:[%s8] sm:$0x1]
        %v2271 = vadd.f32 %v2269, %v2270
        %v2272 = vmax.f32 %v2271, 0.0
        %v2273 = vld [vmem:[%s9] sm:$0xff]
        %v2274 = vld [vmem:[%s9 + $0x8] sm:$0xff]
        %v2275 = vld [vmem:[%s9 + $0x10] sm:$0xff]
        %v2276 = vld [vmem:[%s9 + $0x18] sm:$0xff]
        %v2277 = vld [vmem:[%s9 + $0x20] sm:$0xff]
        %v2278 = vld [vmem:[%s9 + $0x28] sm:$0xff]
        %v2279 = vld [vmem:[%s9 + $0x30] sm:$0xff]
        %v2280 = vld [vmem:[%s9 + $0x38] sm:$0xff]
        %v2281 = vld [vmem:[%s9 + $0x40] sm:$0xff]
        %v2282 = vld [vmem:[%s9 + $0x48] sm:$0xff]
        %v2283 = vld [vmem:[%s9 + $0x50] sm:$0xff]
        %v2284 = vld [vmem:[%s9 + $0x58] sm:$0xff]
        %v2285 = vld [vmem:[%s9 + $0x60] sm:$0xff]
        %v2286 = vld [vmem:[%s9 + $0x68] sm:$0xff]
        %v2287 = vld [vmem:[%s9 + $0x70] sm:$0xff]
        %v2288 = vld [vmem:[%s10] sm:$0x1]
        %vm2289 = vcmask 982016
        %v2291 = vsel %vm2289, %v2272, 0
        %2293 = vmatpush.msra.mxu0 0.0
        %2294 = vmatpush.msra.mxu0 %v2287
        %2295 = vmatpush.msra.mxu0 %v2286
        %2296 = vmatpush.msra.mxu0 %v2285
        %2297 = vmatpush.msra.mxu0 %v2284
        %2298 = vmatpush.msra.mxu0 %v2283
        %2299 = vmatpush.msra.mxu0 %v2282
        %2300 = vmatpush.msra.mxu0 %v2281
        %2301 = vmatpush.msra.mxu0 %v2280
        %2302 = vmatpush.msra.mxu0 %v2279
        %2303 = vmatpush.msra.mxu0 %v2278
        %2304 = vmatpush.msra.mxu0 %v2277
        %2305 = vmatpush.msra.mxu0 %v2276
        %2306 = vmatpush.msra.mxu0 %v2275
        %2307 = vmatpush.msra.mxu0 %v2274
        %2308 = vmatpush.msra.mxu0 %v2273
        %2309 = vmatmul.f32.gmra.mxu0 %v2291
        %v2310 = vpop.f32.mrf.mxu0
        %v2311 = vadd.f32 %v2288, %v2310
        %2312 = vdwg.mxu0
        %v2313 = vmax.f32 %v2311, 0.0
        %v2314 = vld [vmem:[%s11] sm:$0xff]
        %v2315 = vld [vmem:[%s11 + $0x8] sm:$0xff]
        %v2316 = vld [vmem:[%s11 + $0x10] sm:$0xff]
        %v2317 = vld [vmem:[%s11 + $0x18] sm:$0xff]
        %v2318 = vld [vmem:[%s11 + $0x20] sm:$0xff]
        %v2319 = vld [vmem:[%s11 + $0x28] sm:$0xff]
        %v2320 = vld [vmem:[%s11 + $0x30] sm:$0xff]
        %v2321 = vld [vmem:[%s11 + $0x38] sm:$0xff]
        %v2322 = vld [vmem:[%s11 + $0x40] sm:$0xff]
        %v2323 = vld [vmem:[%s11 + $0x48] sm:$0xff]
        %v2324 = vld [vmem:[%s11 + $0x50] sm:$0xf]
        %v2325 = vld [vmem:[%s12] sm:$0x1]
        %vm2326 = vcmask 687104
        %v2328 = vsel %vm2326, %v2313, 0
        %v2331 = vsel %vm795, %v2324, 0
        %2333 = vmatpush.msra.mxu0 0.0
        %2334 = vmatpush.msra.mxu0 0.0
        %2335 = vmatpush.msra.mxu0 0.0
        %2336 = vmatpush.msra.mxu0 0.0
        %2337 = vmatpush.msra.mxu0 0.0
        %2338 = vmatpush.msra.mxu0 %v2331
        %2339 = vmatpush.msra.mxu0 %v2323
        %2340 = vmatpush.msra.mxu0 %v2322
        %2341 = vmatpush.msra.mxu0 %v2321
        %2342 = vmatpush.msra.mxu0 %v2320
        %2343 = vmatpush.msra.mxu0 %v2319
        %2344 = vmatpush.msra.mxu0 %v2318
        %2345 = vmatpush.msra.mxu0 %v2317
        %2346 = vmatpush.msra.mxu0 %v2316
        %2347 = vmatpush.msra.mxu0 %v2315
        %2348 = vmatpush.msra.mxu0 %v2314
        %2349 = vmatmul.f32.gmra.mxu0 %v2328
        %v2350 = vpop.f32.mrf.mxu0
        %v2351 = vadd.f32 %v2325, %v2350
        %2352 = vdwg.mxu0
        %2353 = vst [vmem:[%s432] sm:$0x1] %v2351
        %s2354 = sand.u32 %s313, 1
        %s2355 = scalar_lea.sflag [#allocation3], %s2354
        %s2356 = sand.u32 %s313, 1
        %s2357 = scalar_lea.vmem [#allocation2], %s2356
        // Predicated region
        $region73: #{lenet5_forward.1} parent=71 // pred_check
          %p2358 = pneg %p323
        $region74: #{lenet5_forward.1} parent=71 // pred_check_branch
          %2360 = sbr.rel (%p2358) target = $region76
        $region75: #{lenet5_forward.1} parent=71 // pred_region
          %2362 = vsyncadd %s2355, 0
          %s2363 = scalar_lea.hbm %s13, %s27
          %s2365 = sshll.u32 %s2357, 4
          %s2366 = int_to_ptr.vmem [resolvable:$true] %s2365
          %s2367 = sshll.u32 %s2363, 4
          %s2368 = int_to_ptr.hbm [resolvable:$true] %s2367
          %2370 = dma.vmem_to_hbm [thread:$0]  %s2366, 16, %s2368, %s2355
        $region76: #{lenet5_forward.1} parent=71 // pred_fallthru
          _
      $region72: #{lenet5_forward.1} parent=5 // pred_fallthru
        _
      %p2371 = scmp.le.s32.totalorder 2, %s22
      // Predicated region
      $region77: #{lenet5_forward.1} parent=5 // pred_check
        %p2372 = pneg %p2371
      $region78: #{lenet5_forward.1} parent=5 // pred_check_branch
        %2374 = sbr.rel (%p2372) target = $region80
      $region79: #{lenet5_forward.1} parent=5 // pred_region
        %s2375 = ssub.s32 %s22, 2
        // Predicated region
        $region81: #{lenet5_forward.1} parent=79 // pred_check
          %p2376 = pneg %p329
        $region82: #{lenet5_forward.1} parent=79 // pred_check_branch
          %2378 = sbr.rel (%p2376) target = $region84
        $region83: #{lenet5_forward.1} parent=79 // pred_region
          %s2379 = sand.u32 %s314, 1
          %s2380 = scalar_lea.sflag [#allocation3], %s2379
          %s2381 = sand.u32 %s314, 1
          %s2382 = scalar_lea.vmem [#allocation2], %s2381
          %2384 = dma.done %s2380, 16
        $region84: #{lenet5_forward.1} parent=79 // pred_fallthru
          _
      $region80: #{lenet5_forward.1} parent=5 // pred_fallthru
        _
    $region6: #{lenet5_forward.1} parent=1 // loop_footer
      %s26 = sadd.s32 1, %s22
    $region7: #{lenet5_forward.1} parent=1 // loop_footer_branch
      %21 = sbr.rel target = $region3
    $region8: #{lenet5_forward.1} parent=1 // loop_exit
      _
    %2385 = vsyncpa [#allocation3], 1
    %s2386 = scalar_lea.sflag [#allocation3], 1
    %2387 = vsyncpa %s2386, 1

</llo_original>
